<compile_context>
chip_gen: v5e
topology: v5e:2x2
jax: 0.10.0
libtpu: 0.0.40
codegen_flags: <defaults>
</compile_context>

<pallas_src>
import functools

import jax
import jax.numpy as jnp
from jax.experimental import pallas as pl
from jax.experimental.pallas import tpu as pltpu

HIDDEN = 256
OUT_DIM = 4
W4_PAD = 128       # last-layer weight padded to a full lane group for the MXU
MAX_TILE_B = 1024  # rows per grid step at large batch (per-step VMEM still tiny)
MIN_TILE_B = 16
TARGET_STEPS = 4   # >= 2 grid steps per TensorCore on v7x


def _act_dtype_for_device():
    """bf16 activations/ELU on v6e/v7x (bf16-native VPU/EUP); f32 on v5e and older."""
    try:
        kind = jax.devices()[0].device_kind.lower()
    except Exception:
        return jnp.bfloat16
    if any(v in kind for v in ("v2", "v3", "v4", "v5")):
        return jnp.float32
    return jnp.bfloat16


def _elu(x):
    # F.elu with alpha=1.0. exp of the clamped input avoids inf in the discarded branch.
    return jnp.where(x > 0, x, jnp.exp(jnp.minimum(x, 0.0)) - 1.0)


def _softplus(x):
    # F.softplus with beta=1, threshold=20 (PyTorch's numerically-stable form).
    return jnp.where(x > 20.0, x, jnp.log1p(jnp.exp(x)))


def value_net_kernel(x_ref, w1_ref, b1_ref, w2_ref, b2_ref,
                     w3_ref, b3_ref, w4_ref, b4_ref, o_ref, *, act_dtype):
    def hidden_layer(h_bf16, w_ref, b_ref):
        # bf16 x bf16 matmul, f32 accumulation; bias add in f32.
        h = jnp.dot(h_bf16, w_ref[...], preferred_element_type=jnp.float32) + b_ref[...]
        # ELU in bf16 on v6e/v7x, f32 on v5e; next matmul consumes bf16 either way.
        return _elu(h.astype(act_dtype)).astype(jnp.bfloat16)

    h = hidden_layer(x_ref[...], w1_ref, b1_ref)   # (TILE_B, 16)  -> (TILE_B, 256)
    h = hidden_layer(h, w2_ref, b2_ref)            # (TILE_B, 256) -> (TILE_B, 256)
    h = hidden_layer(h, w3_ref, b3_ref)            # (TILE_B, 256) -> (TILE_B, 256)
    # Final layer: lane-dense MXU matmul against the 128-col padded W4, then keep only
    # the 4 real columns so HBM writeback is 16 B/row (no padded f32 slab + XLA slice).
    h = jnp.dot(h, w4_ref[...], preferred_element_type=jnp.float32) + b4_ref[...]
    o_ref[...] = _softplus(h[:, :OUT_DIM]).astype(o_ref.dtype)


def _resident_spec(arr):
    """Full-array block that maps to block (0,...,0) at every grid step.

    Weights/biases (~330 KiB total) therefore stay resident in VMEM across the grid.
    (We intentionally skip pipeline_mode=pl.Buffered(1); the redundant second buffer
    for the resident operands is negligible at these sizes.)"""
    ndim = arr.ndim
    return pl.BlockSpec(arr.shape, lambda i, _n=ndim: (0,) * _n)


def _choose_tile(batch):
    """Adaptive batch tile: >= TARGET_STEPS grid steps when possible, <= MAX_TILE_B rows,
    multiple of 16 sublanes (bf16 packing), without grossly padding small batches."""
    tile = -(-batch // TARGET_STEPS)        # ceil(batch / TARGET_STEPS)
    tile = -(-tile // 16) * 16              # round up to a multiple of 16
    tile = max(MIN_TILE_B, min(MAX_TILE_B, tile))
    n_tiles = -(-batch // tile)
    return tile, n_tiles


def value_net_forward(x, params):
    """x: (B, size*size) float32/bfloat16. params from init_params. Returns (B, 4) f32."""
    B, in_dim = x.shape
    tile_b, n_tiles = _choose_tile(B)
    b_pad = tile_b * n_tiles

    x = x.astype(jnp.bfloat16)              # halve x HBM read; matmul consumes bf16 anyway
    if b_pad != B:
        x = jnp.pad(x, ((0, b_pad - B), (0, 0)))

    args = (x,
            params["w1"], params["b1"],
            params["w2"], params["b2"],
            params["w3"], params["b3"],
            params["w4"], params["b4"])

    in_specs = [pl.BlockSpec((tile_b, in_dim), lambda i: (i, 0))]   # x: tiled over batch
    in_specs += [_resident_spec(a) for a in args[1:]]               # weights/biases resident
    out_spec = pl.BlockSpec((tile_b, OUT_DIM), lambda i: (i, 0))    # 4 real columns only

    flops = 2 * b_pad * (in_dim * HIDDEN + 2 * HIDDEN * HIDDEN + HIDDEN * W4_PAD)
    transcendentals = b_pad * (3 * HIDDEN + 2 * OUT_DIM)            # elu exp + softplus exp/log1p
    bytes_accessed = (sum(int(a.size) * a.dtype.itemsize for a in args)
                      + b_pad * OUT_DIM * 4)

    kernel = functools.partial(value_net_kernel, act_dtype=_act_dtype_for_device())

    out = pl.pallas_call(
        kernel,
        out_shape=jax.ShapeDtypeStruct((b_pad, OUT_DIM), jnp.float32),
        grid=(n_tiles,),
        in_specs=in_specs,
        out_specs=out_spec,
        compiler_params=pltpu.CompilerParams(
            dimension_semantics=("parallel",)),
        cost_estimate=pl.CostEstimate(flops=flops,
                                      transcendentals=transcendentals,
                                      bytes_accessed=bytes_accessed),
    )(*args)
    return out[:B] if b_pad != B else out


def init_params(key, size=4):
    """Xavier-uniform weights (stored (in,out), cast to bf16), zero biases (f32, (1,out)).
    Final layer is zero-padded from 4 to W4_PAD output columns for a lane-dense matmul."""
    dims = [size * size, HIDDEN, HIDDEN, HIDDEN, OUT_DIM]
    params = {}
    keys = jax.random.split(key, 4)
    for i, (fan_in, fan_out) in enumerate(zip(dims[:-1], dims[1:]), start=1):
        bound = jnp.sqrt(6.0 / (fan_in + fan_out))
        w = jax.random.uniform(keys[i - 1], (fan_in, fan_out),
                               jnp.float32, -bound, bound)
        b = jnp.zeros((1, fan_out), jnp.float32)
        if fan_out == OUT_DIM:  # pad last layer so the MXU output stays lane-dense
            w = jnp.pad(w, ((0, 0), (0, W4_PAD - OUT_DIM)))
            b = jnp.pad(b, ((0, 0), (0, W4_PAD - OUT_DIM)))
        params[f"w{i}"] = w.astype(jnp.bfloat16)
        params[f"b{i}"] = b  # biases kept f32; added after f32 accumulation
    return params


if __name__ == "__main__":
    key = jax.random.PRNGKey(0)
    size = 4
    batch = 387  # non-multiple of the tile: exercises 4 grid steps + batch-row padding
    k_in, k_params = jax.random.split(key)
    x = jax.random.normal(k_in, (batch, size * size), jnp.float32)
    params = init_params(k_params, size=size)

    out = jax.block_until_ready(value_net_forward(x, params))

    # Pure-JAX reference mirroring the kernel's dtype choices exactly.
    act_dtype = _act_dtype_for_device()

    def ref(x, p):
        h = x.astype(jnp.bfloat16)
        for i in range(1, 4):
            h = jnp.dot(h, p[f"w{i}"], preferred_element_type=jnp.float32) + p[f"b{i}"]
            h = h.astype(act_dtype)
            h = jnp.where(h > 0, h, jnp.exp(jnp.minimum(h, 0.0)) - 1.0)
            h = h.astype(jnp.bfloat16)
        h = jnp.dot(h, p["w4"], preferred_element_type=jnp.float32) + p["b4"]
        h = h[:, :OUT_DIM]
        return jnp.where(h > 20.0, h, jnp.log1p(jnp.exp(h)))

    expected = ref(x, params)
    assert out.shape == (batch, OUT_DIM)
    max_err = float(jnp.max(jnp.abs(out - expected)))
    assert jnp.allclose(out, expected, atol=2e-2, rtol=2e-2), max_err
    print("KERNEL_OK")
</pallas_src>

<mosaic_0001>
module attributes {stable_mosaic.version = 11 : i64} {
  func.func @value_net_kernel(%arg0: i32, %arg1: memref<112x16xbf16, #tpu.memory_space<vmem>>, %arg2: memref<16x256xbf16, #tpu.memory_space<vmem>>, %arg3: memref<1x256xf32, #tpu.memory_space<vmem>>, %arg4: memref<256x256xbf16, #tpu.memory_space<vmem>>, %arg5: memref<1x256xf32, #tpu.memory_space<vmem>>, %arg6: memref<256x256xbf16, #tpu.memory_space<vmem>>, %arg7: memref<1x256xf32, #tpu.memory_space<vmem>>, %arg8: memref<256x128xbf16, #tpu.memory_space<vmem>>, %arg9: memref<1x128xf32, #tpu.memory_space<vmem>>, %arg10: memref<112x4xf32, #tpu.memory_space<vmem>>) attributes {dimension_semantics = [#tpu.dimension_semantics<parallel>], iteration_bounds = array<i64: 4>, scalar_prefetch = 0 : i64, scratch_operands = 0 : i64, tpu.core_type = #tpu.core_type<tc>, window_params = [{transform_indices = @transform_0, window_bounds = array<i64: 112, 16>}, {pipeline_mode = #tpu.pipeline_mode<synchronous>, transform_indices = @transform_1, window_bounds = array<i64: 16, 256>}, {pipeline_mode = #tpu.pipeline_mode<synchronous>, transform_indices = @transform_2, window_bounds = array<i64: 1, 256>}, {pipeline_mode = #tpu.pipeline_mode<synchronous>, transform_indices = @transform_3, window_bounds = array<i64: 256, 256>}, {pipeline_mode = #tpu.pipeline_mode<synchronous>, transform_indices = @transform_4, window_bounds = array<i64: 1, 256>}, {pipeline_mode = #tpu.pipeline_mode<synchronous>, transform_indices = @transform_5, window_bounds = array<i64: 256, 256>}, {pipeline_mode = #tpu.pipeline_mode<synchronous>, transform_indices = @transform_6, window_bounds = array<i64: 1, 256>}, {pipeline_mode = #tpu.pipeline_mode<synchronous>, transform_indices = @transform_7, window_bounds = array<i64: 256, 128>}, {pipeline_mode = #tpu.pipeline_mode<synchronous>, transform_indices = @transform_8, window_bounds = array<i64: 1, 128>}, {transform_indices = @transform_9, window_bounds = array<i64: 112, 4>}]} {
    %c0 = arith.constant 0 : index
    %c0_0 = arith.constant 0 : index
    %0 = vector.load %arg1[%c0, %c0_0] : memref<112x16xbf16, #tpu.memory_space<vmem>>, vector<112x16xbf16>
    %c0_1 = arith.constant 0 : index
    %c0_2 = arith.constant 0 : index
    %1 = vector.load %arg2[%c0_1, %c0_2] : memref<16x256xbf16, #tpu.memory_space<vmem>>, vector<16x256xbf16>
    %cst = arith.constant dense<0.000000e+00> : vector<112x256xf32>
    %2 = tpu.matmul %0, %1, %cst {dimension_numbers = #tpu.dot_dimension_numbers<[1], [0], [0], [1], [0, 0, 1, 1], [], []>} : vector<112x16xbf16>, vector<16x256xbf16>, vector<112x256xf32> -> vector<112x256xf32>
    %c0_3 = arith.constant 0 : index
    %c0_4 = arith.constant 0 : index
    %3 = vector.load %arg3[%c0_3, %c0_4] : memref<1x256xf32, #tpu.memory_space<vmem>>, vector<1x256xf32>
    %4 = vector.broadcast %3 : vector<1x256xf32> to vector<112x256xf32>
    %5 = arith.addf %2, %4 : vector<112x256xf32>
    %6 = arith.truncf %5 : vector<112x256xf32> to vector<112x256xbf16>
    %cst_5 = arith.constant 0.000000e+00 : bf16
    %7 = vector.broadcast %cst_5 : bf16 to vector<112x256xbf16>
    %8 = arith.cmpf ogt, %6, %7 : vector<112x256xbf16>
    %cst_6 = arith.constant 0.000000e+00 : bf16
    %9 = vector.broadcast %cst_6 : bf16 to vector<112x256xbf16>
    %10 = arith.minimumf %6, %9 : vector<112x256xbf16>
    %11 = math.exp %10 : vector<112x256xbf16>
    %cst_7 = arith.constant 1.000000e+00 : bf16
    %12 = vector.broadcast %cst_7 : bf16 to vector<112x256xbf16>
    %13 = arith.subf %11, %12 : vector<112x256xbf16>
    %14 = arith.select %8, %6, %13 : vector<112x256xi1>, vector<112x256xbf16>
    %c0_8 = arith.constant 0 : index
    %c0_9 = arith.constant 0 : index
    %15 = vector.load %arg4[%c0_8, %c0_9] : memref<256x256xbf16, #tpu.memory_space<vmem>>, vector<256x256xbf16>
    %cst_10 = arith.constant dense<0.000000e+00> : vector<112x256xf32>
    %16 = tpu.matmul %14, %15, %cst_10 {dimension_numbers = #tpu.dot_dimension_numbers<[1], [0], [0], [1], [0, 0, 1, 1], [], []>} : vector<112x256xbf16>, vector<256x256xbf16>, vector<112x256xf32> -> vector<112x256xf32>
    %c0_11 = arith.constant 0 : index
    %c0_12 = arith.constant 0 : index
    %17 = vector.load %arg5[%c0_11, %c0_12] : memref<1x256xf32, #tpu.memory_space<vmem>>, vector<1x256xf32>
    %18 = vector.broadcast %17 : vector<1x256xf32> to vector<112x256xf32>
    %19 = arith.addf %16, %18 : vector<112x256xf32>
    %20 = arith.truncf %19 : vector<112x256xf32> to vector<112x256xbf16>
    %cst_13 = arith.constant 0.000000e+00 : bf16
    %21 = vector.broadcast %cst_13 : bf16 to vector<112x256xbf16>
    %22 = arith.cmpf ogt, %20, %21 : vector<112x256xbf16>
    %cst_14 = arith.constant 0.000000e+00 : bf16
    %23 = vector.broadcast %cst_14 : bf16 to vector<112x256xbf16>
    %24 = arith.minimumf %20, %23 : vector<112x256xbf16>
    %25 = math.exp %24 : vector<112x256xbf16>
    %cst_15 = arith.constant 1.000000e+00 : bf16
    %26 = vector.broadcast %cst_15 : bf16 to vector<112x256xbf16>
    %27 = arith.subf %25, %26 : vector<112x256xbf16>
    %28 = arith.select %22, %20, %27 : vector<112x256xi1>, vector<112x256xbf16>
    %c0_16 = arith.constant 0 : index
    %c0_17 = arith.constant 0 : index
    %29 = vector.load %arg6[%c0_16, %c0_17] : memref<256x256xbf16, #tpu.memory_space<vmem>>, vector<256x256xbf16>
    %cst_18 = arith.constant dense<0.000000e+00> : vector<112x256xf32>
    %30 = tpu.matmul %28, %29, %cst_18 {dimension_numbers = #tpu.dot_dimension_numbers<[1], [0], [0], [1], [0, 0, 1, 1], [], []>} : vector<112x256xbf16>, vector<256x256xbf16>, vector<112x256xf32> -> vector<112x256xf32>
    %c0_19 = arith.constant 0 : index
    %c0_20 = arith.constant 0 : index
    %31 = vector.load %arg7[%c0_19, %c0_20] : memref<1x256xf32, #tpu.memory_space<vmem>>, vector<1x256xf32>
    %32 = vector.broadcast %31 : vector<1x256xf32> to vector<112x256xf32>
    %33 = arith.addf %30, %32 : vector<112x256xf32>
    %34 = arith.truncf %33 : vector<112x256xf32> to vector<112x256xbf16>
    %cst_21 = arith.constant 0.000000e+00 : bf16
    %35 = vector.broadcast %cst_21 : bf16 to vector<112x256xbf16>
    %36 = arith.cmpf ogt, %34, %35 : vector<112x256xbf16>
    %cst_22 = arith.constant 0.000000e+00 : bf16
    %37 = vector.broadcast %cst_22 : bf16 to vector<112x256xbf16>
    %38 = arith.minimumf %34, %37 : vector<112x256xbf16>
    %39 = math.exp %38 : vector<112x256xbf16>
    %cst_23 = arith.constant 1.000000e+00 : bf16
    %40 = vector.broadcast %cst_23 : bf16 to vector<112x256xbf16>
    %41 = arith.subf %39, %40 : vector<112x256xbf16>
    %42 = arith.select %36, %34, %41 : vector<112x256xi1>, vector<112x256xbf16>
    %c0_24 = arith.constant 0 : index
    %c0_25 = arith.constant 0 : index
    %43 = vector.load %arg8[%c0_24, %c0_25] : memref<256x128xbf16, #tpu.memory_space<vmem>>, vector<256x128xbf16>
    %cst_26 = arith.constant dense<0.000000e+00> : vector<112x128xf32>
    %44 = tpu.matmul %42, %43, %cst_26 {dimension_numbers = #tpu.dot_dimension_numbers<[1], [0], [0], [1], [0, 0, 1, 1], [], []>} : vector<112x256xbf16>, vector<256x128xbf16>, vector<112x128xf32> -> vector<112x128xf32>
    %c0_27 = arith.constant 0 : index
    %c0_28 = arith.constant 0 : index
    %45 = vector.load %arg9[%c0_27, %c0_28] : memref<1x128xf32, #tpu.memory_space<vmem>>, vector<1x128xf32>
    %46 = vector.broadcast %45 : vector<1x128xf32> to vector<112x128xf32>
    %47 = arith.addf %44, %46 : vector<112x128xf32>
    %48 = vector.extract_strided_slice %47 {offsets = [0, 0], sizes = [112, 4], strides = [1, 1]} : vector<112x128xf32> to vector<112x4xf32>
    %cst_29 = arith.constant 2.000000e+01 : f32
    %49 = vector.broadcast %cst_29 : f32 to vector<112x4xf32>
    %50 = arith.cmpf ogt, %48, %49 : vector<112x4xf32>
    %51 = math.exp %48 : vector<112x4xf32>
    %52 = math.log1p %51 : vector<112x4xf32>
    %53 = arith.select %50, %48, %52 : vector<112x4xi1>, vector<112x4xf32>
    %c0_30 = arith.constant 0 : index
    %c0_31 = arith.constant 0 : index
    %54 = vector.load %arg10[%c0_30, %c0_31] : memref<112x4xf32, #tpu.memory_space<vmem>>, vector<112x4xf32>
    tpu.vector_store %arg10[%c0_30, %c0_31], %53 {strides = array<i32>} : memref<112x4xf32, #tpu.memory_space<vmem>>, vector<112x4xf32>,
    return
  }
  func.func @transform_0(%arg0: i32) -> (i32, i32) {
    %c0_i32 = arith.constant 0 : i32
    %c0_i32_0 = arith.constant 0 : i32
    return %arg0, %c0_i32 : i32, i32
  }
  func.func @transform_1(%arg0: i32) -> (i32, i32) {
    %c0_i32 = arith.constant 0 : i32
    %c0_i32_0 = arith.constant 0 : i32
    %c0_i32_1 = arith.constant 0 : i32
    return %c0_i32, %c0_i32_0 : i32, i32
  }
  func.func @transform_2(%arg0: i32) -> (i32, i32) {
    %c0_i32 = arith.constant 0 : i32
    %c0_i32_0 = arith.constant 0 : i32
    %c0_i32_1 = arith.constant 0 : i32
    return %c0_i32, %c0_i32_0 : i32, i32
  }
  func.func @transform_3(%arg0: i32) -> (i32, i32) {
    %c0_i32 = arith.constant 0 : i32
    %c0_i32_0 = arith.constant 0 : i32
    %c0_i32_1 = arith.constant 0 : i32
    return %c0_i32, %c0_i32_0 : i32, i32
  }
  func.func @transform_4(%arg0: i32) -> (i32, i32) {
    %c0_i32 = arith.constant 0 : i32
    %c0_i32_0 = arith.constant 0 : i32
    %c0_i32_1 = arith.constant 0 : i32
    return %c0_i32, %c0_i32_0 : i32, i32
  }
  func.func @transform_5(%arg0: i32) -> (i32, i32) {
    %c0_i32 = arith.constant 0 : i32
    %c0_i32_0 = arith.constant 0 : i32
    %c0_i32_1 = arith.constant 0 : i32
    return %c0_i32, %c0_i32_0 : i32, i32
  }
  func.func @transform_6(%arg0: i32) -> (i32, i32) {
    %c0_i32 = arith.constant 0 : i32
    %c0_i32_0 = arith.constant 0 : i32
    %c0_i32_1 = arith.constant 0 : i32
    return %c0_i32, %c0_i32_0 : i32, i32
  }
  func.func @transform_7(%arg0: i32) -> (i32, i32) {
    %c0_i32 = arith.constant 0 : i32
    %c0_i32_0 = arith.constant 0 : i32
    %c0_i32_1 = arith.constant 0 : i32
    return %c0_i32, %c0_i32_0 : i32, i32
  }
  func.func @transform_8(%arg0: i32) -> (i32, i32) {
    %c0_i32 = arith.constant 0 : i32
    %c0_i32_0 = arith.constant 0 : i32
    %c0_i32_1 = arith.constant 0 : i32
    return %c0_i32, %c0_i32_0 : i32, i32
  }
  func.func @transform_9(%arg0: i32) -> (i32, i32) {
    %c0_i32 = arith.constant 0 : i32
    %c0_i32_0 = arith.constant 0 : i32
    return %arg0, %c0_i32 : i32, i32
  }
}

</mosaic_0001>

<llo_original>
// kernel: tpu_custom_call.1
$region0: #{tpu_custom_call.1}
  #allocation0 [shape = 'u32[]', space=smem, size = 0x4, offset = 0x4, fixed_abs, tag = 'smem constant byte address 0x4 - core index']
  #allocation1 [shape = 'u32[72,128]{1,0:T(1,128)}', space=vmem, size = 0x9000, scoped, tag = 'internal scratch']
  %s0 = inlined_call_operand.vmem [shape: bf16[448,16], index: 0, kind: input, shape index: {}]
  %s1 = inlined_call_operand.hbm [shape: bf16[16,256], index: 1, kind: input, shape index: {}]
  %s2 = inlined_call_operand.vmem [shape: f32[1,256], index: 2, kind: input, shape index: {}]
  %s3 = inlined_call_operand.vmem [shape: bf16[256,256], index: 3, kind: input, shape index: {}]
  %s4 = inlined_call_operand.hbm [shape: f32[1,256], index: 4, kind: input, shape index: {}]
  %s5 = inlined_call_operand.hbm [shape: bf16[256,256], index: 5, kind: input, shape index: {}]
  %s6 = inlined_call_operand.vmem [shape: f32[1,256], index: 6, kind: input, shape index: {}]
  %s7 = inlined_call_operand.hbm [shape: bf16[256,128], index: 7, kind: input, shape index: {}]
  %s8 = inlined_call_operand.vmem [shape: f32[1,128], index: 8, kind: input, shape index: {}]
  %s9 = inlined_call_operand.vmem [shape: f32[448,4], index: 9, kind: output, shape index: {}]
  %s10 = sld [smem:[#allocation0]]
  $region85: #{tpu_custom_call.1} parent=0
    _
  %s12 = ssub.s32 1, %s10
  %s13 = scalar_select 0, %s12, %s10
  $region1: #{tpu_custom_call.1} parent=0
    #allocation2 [shape = 'u8[8192]{0}', space=vmem, size = 0x2000, scoped, tag = 'input window, operand 1, single buffered']
    #allocation3 [shape = 's32[2]{0}', space=sflag, size = 0x8, scoped, tag = 'scoped memory for tpu_custom_call.1']
    #allocation4 [shape = 'u8[1024]{0}', space=vmem, size = 0x400, scoped, tag = 'input window, operand 4, single buffered']
    #allocation5 [shape = 's32[1]{0}', space=sflag, size = 0x4, scoped, tag = 'scoped memory for tpu_custom_call.1']
    #allocation6 [shape = 'u8[131072]{0}', space=vmem, size = 0x20000, scoped, tag = 'input window, operand 5, single buffered']
    #allocation7 [shape = 'u8[65536]{0}', space=vmem, size = 0x10000, scoped, tag = 'input window, operand 7, single buffered']
    #allocation8 [shape = 's32[1]{0}', space=sflag, size = 0x4, scoped, tag = 'scoped memory for tpu_custom_call.1']
    %14 = vsyncpa [#allocation3], 0
    %15 = vsyncpa [#allocation5], 0
    %16 = vsyncpa [#allocation8], 0
    loop: start=0, step=1, limit=6
    $region2: #{tpu_custom_call.1} parent=1 // loop_pre_header
      _
    $region3: #{tpu_custom_call.1} parent=1 // loop_header
      %s18 = sphi 0, %s22
      %p19 = scmp.ge.s32.totalorder %s18, 6
      %s28 = sphi 0, %s30
      %s31 = sphi 0, %s28
      %s32 = sphi 0, %s31
      %s48 = sphi 0, %s32
      %s52 = sphi 0, %s52
      %s54 = sphi 0, %s52
      %s55 = sphi 0, %s54
      %s69 = sphi 0, %s55
      %s73 = sphi 0, %s73
      %s75 = sphi 0, %s73
      %s76 = sphi 0, %s75
      %s90 = sphi 0, %s76
      %s94 = sphi 0, %s94
      %s96 = sphi 0, %s94
      %s97 = sphi 0, %s96
      %s111 = sphi 0, %s97
      %s115 = sphi 0, %s115
      %s117 = sphi 0, %s115
      %s118 = sphi 0, %s117
      %s132 = sphi 0, %s118
      %s136 = sphi 0, %s136
      %s138 = sphi 0, %s136
      %s139 = sphi 0, %s138
      %s153 = sphi 0, %s139
      %s157 = sphi 0, %s157
      %s159 = sphi 0, %s157
      %s160 = sphi 0, %s159
      %s174 = sphi 0, %s160
      %s178 = sphi 0, %s178
      %s180 = sphi 0, %s178
      %s181 = sphi 0, %s180
      %s195 = sphi 0, %s181
      %s199 = sphi 0, %s199
      %s201 = sphi 0, %s199
      %s202 = sphi 0, %s201
      %s216 = sphi 0, %s202
      %s222 = sphi 0, %s224
      %s225 = sphi 0, %s222
      %s226 = sphi 0, %s225
      %s242 = sphi 0, %s226
    $region4: #{tpu_custom_call.1} parent=1 // loop_header_branch
      %21 = sbr.rel (%p19) target = $region8
    $region5: #{tpu_custom_call.1} parent=1 // loop_body
      %s23 = ssub.s32 %s18, 1
      %s24 = ssub.s32 %s18, 2
      %s25 = sadd.s32 %s18, 1
      %s26 = ssub.s32 %s18, %s25
      %p27 = scmp.eq.s32.totalorder %s26, 0
      %s29 = sadd.s32 %s28, 1
      %s30 = scalar_select %p27, %s28, %s29
      %p33 = pneg %p27
      %p34 = scmp.eq.s32.totalorder %s18, 3
      %p35 = por %p33, %p34
      %p36 = scmp.ne.s32.totalorder %s28, %s31
      %p37 = scmp.eq.s32.totalorder %s18, 0
      %p38 = por %p36, %p37
      %p39 = scmp.ne.s32.totalorder %s28, %s31
      %p40 = scmp.eq.s32.totalorder %s23, 3
      %p41 = por %p39, %p40
      %p42 = scmp.ne.s32.totalorder %s31, %s32
      %p43 = scmp.eq.s32.totalorder %s23, 0
      %p44 = por %p42, %p43
      %p45 = scmp.ne.s32.totalorder %s31, %s32
      %p46 = scmp.eq.s32.totalorder %s24, 3
      %p47 = por %p45, %p46
      %p49 = scmp.ne.s32.totalorder %s32, %s48
      %p50 = scmp.eq.s32.totalorder %s24, 0
      %p51 = por %p49, %p50
      %s53 = sadd.s32 %s52, 1
      %p56 = scmp.eq.s32.totalorder %s18, 3
      %p57 = scmp.ne.s32.totalorder %s52, %s54
      %p58 = scmp.eq.s32.totalorder %s18, 0
      %p59 = por %p57, %p58
      %p60 = scmp.ne.s32.totalorder %s52, %s54
      %p61 = scmp.eq.s32.totalorder %s23, 3
      %p62 = por %p60, %p61
      %p63 = scmp.ne.s32.totalorder %s54, %s55
      %p64 = scmp.eq.s32.totalorder %s23, 0
      %p65 = por %p63, %p64
      %p66 = scmp.ne.s32.totalorder %s54, %s55
      %p67 = scmp.eq.s32.totalorder %s24, 3
      %p68 = por %p66, %p67
      %p70 = scmp.ne.s32.totalorder %s55, %s69
      %p71 = scmp.eq.s32.totalorder %s24, 0
      %p72 = por %p70, %p71
      %s74 = sadd.s32 %s73, 1
      %p77 = scmp.eq.s32.totalorder %s18, 3
      %p78 = scmp.ne.s32.totalorder %s73, %s75
      %p79 = scmp.eq.s32.totalorder %s18, 0
      %p80 = por %p78, %p79
      %p81 = scmp.ne.s32.totalorder %s73, %s75
      %p82 = scmp.eq.s32.totalorder %s23, 3
      %p83 = por %p81, %p82
      %p84 = scmp.ne.s32.totalorder %s75, %s76
      %p85 = scmp.eq.s32.totalorder %s23, 0
      %p86 = por %p84, %p85
      %p87 = scmp.ne.s32.totalorder %s75, %s76
      %p88 = scmp.eq.s32.totalorder %s24, 3
      %p89 = por %p87, %p88
      %p91 = scmp.ne.s32.totalorder %s76, %s90
      %p92 = scmp.eq.s32.totalorder %s24, 0
      %p93 = por %p91, %p92
      %s95 = sadd.s32 %s94, 1
      %p98 = scmp.eq.s32.totalorder %s18, 3
      %p99 = scmp.ne.s32.totalorder %s94, %s96
      %p100 = scmp.eq.s32.totalorder %s18, 0
      %p101 = por %p99, %p100
      %p102 = scmp.ne.s32.totalorder %s94, %s96
      %p103 = scmp.eq.s32.totalorder %s23, 3
      %p104 = por %p102, %p103
      %p105 = scmp.ne.s32.totalorder %s96, %s97
      %p106 = scmp.eq.s32.totalorder %s23, 0
      %p107 = por %p105, %p106
      %p108 = scmp.ne.s32.totalorder %s96, %s97
      %p109 = scmp.eq.s32.totalorder %s24, 3
      %p110 = por %p108, %p109
      %p112 = scmp.ne.s32.totalorder %s97, %s111
      %p113 = scmp.eq.s32.totalorder %s24, 0
      %p114 = por %p112, %p113
      %s116 = sadd.s32 %s115, 1
      %p119 = scmp.eq.s32.totalorder %s18, 3
      %p120 = scmp.ne.s32.totalorder %s115, %s117
      %p121 = scmp.eq.s32.totalorder %s18, 0
      %p122 = por %p120, %p121
      %p123 = scmp.ne.s32.totalorder %s115, %s117
      %p124 = scmp.eq.s32.totalorder %s23, 3
      %p125 = por %p123, %p124
      %p126 = scmp.ne.s32.totalorder %s117, %s118
      %p127 = scmp.eq.s32.totalorder %s23, 0
      %p128 = por %p126, %p127
      %p129 = scmp.ne.s32.totalorder %s117, %s118
      %p130 = scmp.eq.s32.totalorder %s24, 3
      %p131 = por %p129, %p130
      %p133 = scmp.ne.s32.totalorder %s118, %s132
      %p134 = scmp.eq.s32.totalorder %s24, 0
      %p135 = por %p133, %p134
      %s137 = sadd.s32 %s136, 1
      %p140 = scmp.eq.s32.totalorder %s18, 3
      %p141 = scmp.ne.s32.totalorder %s136, %s138
      %p142 = scmp.eq.s32.totalorder %s18, 0
      %p143 = por %p141, %p142
      %p144 = scmp.ne.s32.totalorder %s136, %s138
      %p145 = scmp.eq.s32.totalorder %s23, 3
      %p146 = por %p144, %p145
      %p147 = scmp.ne.s32.totalorder %s138, %s139
      %p148 = scmp.eq.s32.totalorder %s23, 0
      %p149 = por %p147, %p148
      %p150 = scmp.ne.s32.totalorder %s138, %s139
      %p151 = scmp.eq.s32.totalorder %s24, 3
      %p152 = por %p150, %p151
      %p154 = scmp.ne.s32.totalorder %s139, %s153
      %p155 = scmp.eq.s32.totalorder %s24, 0
      %p156 = por %p154, %p155
      %s158 = sadd.s32 %s157, 1
      %p161 = scmp.eq.s32.totalorder %s18, 3
      %p162 = scmp.ne.s32.totalorder %s157, %s159
      %p163 = scmp.eq.s32.totalorder %s18, 0
      %p164 = por %p162, %p163
      %p165 = scmp.ne.s32.totalorder %s157, %s159
      %p166 = scmp.eq.s32.totalorder %s23, 3
      %p167 = por %p165, %p166
      %p168 = scmp.ne.s32.totalorder %s159, %s160
      %p169 = scmp.eq.s32.totalorder %s23, 0
      %p170 = por %p168, %p169
      %p171 = scmp.ne.s32.totalorder %s159, %s160
      %p172 = scmp.eq.s32.totalorder %s24, 3
      %p173 = por %p171, %p172
      %p175 = scmp.ne.s32.totalorder %s160, %s174
      %p176 = scmp.eq.s32.totalorder %s24, 0
      %p177 = por %p175, %p176
      %s179 = sadd.s32 %s178, 1
      %p182 = scmp.eq.s32.totalorder %s18, 3
      %p183 = scmp.ne.s32.totalorder %s178, %s180
      %p184 = scmp.eq.s32.totalorder %s18, 0
      %p185 = por %p183, %p184
      %p186 = scmp.ne.s32.totalorder %s178, %s180
      %p187 = scmp.eq.s32.totalorder %s23, 3
      %p188 = por %p186, %p187
      %p189 = scmp.ne.s32.totalorder %s180, %s181
      %p190 = scmp.eq.s32.totalorder %s23, 0
      %p191 = por %p189, %p190
      %p192 = scmp.ne.s32.totalorder %s180, %s181
      %p193 = scmp.eq.s32.totalorder %s24, 3
      %p194 = por %p192, %p193
      %p196 = scmp.ne.s32.totalorder %s181, %s195
      %p197 = scmp.eq.s32.totalorder %s24, 0
      %p198 = por %p196, %p197
      %s200 = sadd.s32 %s199, 1
      %p203 = scmp.eq.s32.totalorder %s18, 3
      %p204 = scmp.ne.s32.totalorder %s199, %s201
      %p205 = scmp.eq.s32.totalorder %s18, 0
      %p206 = por %p204, %p205
      %p207 = scmp.ne.s32.totalorder %s199, %s201
      %p208 = scmp.eq.s32.totalorder %s23, 3
      %p209 = por %p207, %p208
      %p210 = scmp.ne.s32.totalorder %s201, %s202
      %p211 = scmp.eq.s32.totalorder %s23, 0
      %p212 = por %p210, %p211
      %p213 = scmp.ne.s32.totalorder %s201, %s202
      %p214 = scmp.eq.s32.totalorder %s24, 3
      %p215 = por %p213, %p214
      %p217 = scmp.ne.s32.totalorder %s202, %s216
      %p218 = scmp.eq.s32.totalorder %s24, 0
      %p219 = por %p217, %p218
      %s220 = ssub.s32 %s18, %s25
      %p221 = scmp.eq.s32.totalorder %s220, 0
      %s223 = sadd.s32 %s222, 1
      %s224 = scalar_select %p221, %s222, %s223
      %p227 = pneg %p221
      %p228 = scmp.eq.s32.totalorder %s18, 3
      %p229 = por %p227, %p228
      %p230 = scmp.ne.s32.totalorder %s222, %s225
      %p231 = scmp.eq.s32.totalorder %s18, 0
      %p232 = por %p230, %p231
      %p233 = scmp.ne.s32.totalorder %s222, %s225
      %p234 = scmp.eq.s32.totalorder %s23, 3
      %p235 = por %p233, %p234
      %p236 = scmp.ne.s32.totalorder %s225, %s226
      %p237 = scmp.eq.s32.totalorder %s23, 0
      %p238 = por %p236, %p237
      %p239 = scmp.ne.s32.totalorder %s225, %s226
      %p240 = scmp.eq.s32.totalorder %s24, 3
      %p241 = por %p239, %p240
      %p243 = scmp.ne.s32.totalorder %s226, %s242
      %p244 = scmp.eq.s32.totalorder %s24, 0
      %p245 = por %p243, %p244
      %p246 = scmp.le.s32.totalorder 1, %s18
      %p247 = scmp.lt.s32.totalorder %s18, 5
      %p248 = pnand %p246, %p247
      %p249 = pneg %p248
      // Predicated region
      $region9: #{tpu_custom_call.1} parent=5 // pred_check
        _
      $region10: #{tpu_custom_call.1} parent=5 // pred_check_branch
        %251 = sbr.rel (%p248) target = $region12
      $region11: #{tpu_custom_call.1} parent=5 // pred_region
        %s252 = ssub.s32 %s18, 1
        // Predicated region
        $region13: #{tpu_custom_call.1} parent=11 // pred_check
          %p253 = pneg %p65
        $region14: #{tpu_custom_call.1} parent=11 // pred_check_branch
          %255 = sbr.rel (%p253) target = $region16
        $region15: #{tpu_custom_call.1} parent=11 // pred_region
          %257 = vsyncadd [#allocation3], 0
          %s258 = sshll.u32 %s1, 4
          %s259 = int_to_ptr.hbm [resolvable:$true] %s258
          %s260 = sshll.u32 [#allocation2], 4
          %s261 = int_to_ptr.vmem [resolvable:$true] %s260
          %266 = dma.hbm_to_vmem [thread:$0]  %s259, 256, %s261, [#allocation3], 128, 128, 8
        $region16: #{tpu_custom_call.1} parent=11 // pred_fallthru
          _
        // Predicated region
        $region17: #{tpu_custom_call.1} parent=11 // pred_check
          %p267 = pneg %p86
        $region18: #{tpu_custom_call.1} parent=11 // pred_check_branch
          %269 = sbr.rel (%p267) target = $region20
        $region19: #{tpu_custom_call.1} parent=11 // pred_region
          _
        $region20: #{tpu_custom_call.1} parent=11 // pred_fallthru
          _
        // Predicated region
        $region21: #{tpu_custom_call.1} parent=11 // pred_check
          %p270 = pneg %p107
        $region22: #{tpu_custom_call.1} parent=11 // pred_check_branch
          %272 = sbr.rel (%p270) target = $region24
        $region23: #{tpu_custom_call.1} parent=11 // pred_region
          _
        $region24: #{tpu_custom_call.1} parent=11 // pred_fallthru
          _
        // Predicated region
        $region25: #{tpu_custom_call.1} parent=11 // pred_check
          %p273 = pneg %p128
        $region26: #{tpu_custom_call.1} parent=11 // pred_check_branch
          %275 = sbr.rel (%p273) target = $region28
        $region27: #{tpu_custom_call.1} parent=11 // pred_region
          %277 = vsyncadd [#allocation5], 0
          %s279 = sshll.u32 %s4, 4
          %s280 = int_to_ptr.hbm [resolvable:$true] %s279
          %s281 = sshll.u32 [#allocation4], 4
          %s282 = int_to_ptr.vmem [resolvable:$true] %s281
          %284 = dma.hbm_to_vmem [thread:$0]  %s280, 32, %s282, [#allocation5]
        $region28: #{tpu_custom_call.1} parent=11 // pred_fallthru
          _
        // Predicated region
        $region29: #{tpu_custom_call.1} parent=11 // pred_check
          %p285 = pneg %p149
        $region30: #{tpu_custom_call.1} parent=11 // pred_check_branch
          %287 = sbr.rel (%p285) target = $region32
        $region31: #{tpu_custom_call.1} parent=11 // pred_region
          %289 = vsyncadd [#allocation5], 0
          %s290 = sshll.u32 %s5, 4
          %s291 = int_to_ptr.hbm [resolvable:$true] %s290
          %s292 = sshll.u32 [#allocation6], 4
          %s293 = int_to_ptr.vmem [resolvable:$true] %s292
          %298 = dma.hbm_to_vmem [thread:$0]  %s291, 4096, %s293, [#allocation5], 128, 128, 8
        $region32: #{tpu_custom_call.1} parent=11 // pred_fallthru
          _
        // Predicated region
        $region33: #{tpu_custom_call.1} parent=11 // pred_check
          %p299 = pneg %p170
        $region34: #{tpu_custom_call.1} parent=11 // pred_check_branch
          %301 = sbr.rel (%p299) target = $region36
        $region35: #{tpu_custom_call.1} parent=11 // pred_region
          _
        $region36: #{tpu_custom_call.1} parent=11 // pred_fallthru
          _
        // Predicated region
        $region37: #{tpu_custom_call.1} parent=11 // pred_check
          %p302 = pneg %p191
        $region38: #{tpu_custom_call.1} parent=11 // pred_check_branch
          %304 = sbr.rel (%p302) target = $region40
        $region39: #{tpu_custom_call.1} parent=11 // pred_region
          %306 = vsyncadd [#allocation8], 0
          %s307 = sshll.u32 %s7, 4
          %s308 = int_to_ptr.hbm [resolvable:$true] %s307
          %s309 = sshll.u32 [#allocation7], 4
          %s310 = int_to_ptr.vmem [resolvable:$true] %s309
          %315 = dma.hbm_to_vmem [thread:$0]  %s308, 2048, %s310, [#allocation8], 64, 64, 4
        $region40: #{tpu_custom_call.1} parent=11 // pred_fallthru
          _
        // Predicated region
        $region41: #{tpu_custom_call.1} parent=11 // pred_check
          %p316 = pneg %p212
        $region42: #{tpu_custom_call.1} parent=11 // pred_check_branch
          %318 = sbr.rel (%p316) target = $region44
        $region43: #{tpu_custom_call.1} parent=11 // pred_region
          _
        $region44: #{tpu_custom_call.1} parent=11 // pred_fallthru
          _
      $region12: #{tpu_custom_call.1} parent=5 // pred_fallthru
        _
      %p319 = scmp.lt.s32.totalorder %s18, 4
      // Predicated region
      $region45: #{tpu_custom_call.1} parent=5 // pred_check
        %p320 = pneg %p319
      $region46: #{tpu_custom_call.1} parent=5 // pred_check_branch
        %322 = sbr.rel (%p320) target = $region48
      $region47: #{tpu_custom_call.1} parent=5 // pred_region
        // Predicated region
        $region49: #{tpu_custom_call.1} parent=47 // pred_check
          %p323 = pneg %p38
        $region50: #{tpu_custom_call.1} parent=47 // pred_check_branch
          %325 = sbr.rel (%p323) target = $region52
        $region51: #{tpu_custom_call.1} parent=47 // pred_region
          %s326 = smul.u32 14, %s18
          %p327 = scmp.lt.s32.totalorder %s326, 55
          %s328 = scalar_select %p327, %s326, 55
          %s329 = smul.addr %s328, 4
          %s330 = scalar_lea.vmem %s0, %s329
          %s331 = smul.u32 14, %s18
        $region52: #{tpu_custom_call.1} parent=47 // pred_fallthru
          _
      $region48: #{tpu_custom_call.1} parent=5 // pred_fallthru
        _
      %p332 = scmp.le.s32.totalorder 1, %s18
      %p333 = scmp.lt.s32.totalorder %s18, 5
      %p334 = pnand %p332, %p333
      %p335 = pneg %p334
      // Predicated region
      $region53: #{tpu_custom_call.1} parent=5 // pred_check
        _
      $region54: #{tpu_custom_call.1} parent=5 // pred_check_branch
        %337 = sbr.rel (%p334) target = $region56
      $region55: #{tpu_custom_call.1} parent=5 // pred_region
        %s338 = ssub.s32 %s18, 1
        // Predicated region
        $region57: #{tpu_custom_call.1} parent=55 // pred_check
          %p339 = pneg %p65
        $region58: #{tpu_custom_call.1} parent=55 // pred_check_branch
          %341 = sbr.rel (%p339) target = $region60
        $region59: #{tpu_custom_call.1} parent=55 // pred_region
          %343 = dma.done [#allocation3], 256
        $region60: #{tpu_custom_call.1} parent=55 // pred_fallthru
          _
        // Predicated region
        $region61: #{tpu_custom_call.1} parent=55 // pred_check
          %p344 = pneg %p128
        $region62: #{tpu_custom_call.1} parent=55 // pred_check_branch
          %346 = sbr.rel (%p344) target = $region64
        $region63: #{tpu_custom_call.1} parent=55 // pred_region
          %348 = dma.done [#allocation5], 32
        $region64: #{tpu_custom_call.1} parent=55 // pred_fallthru
          _
        // Predicated region
        $region65: #{tpu_custom_call.1} parent=55 // pred_check
          %p349 = pneg %p149
        $region66: #{tpu_custom_call.1} parent=55 // pred_check_branch
          %351 = sbr.rel (%p349) target = $region68
        $region67: #{tpu_custom_call.1} parent=55 // pred_region
          %353 = dma.done [#allocation5], 4096
        $region68: #{tpu_custom_call.1} parent=55 // pred_fallthru
          _
        // Predicated region
        $region69: #{tpu_custom_call.1} parent=55 // pred_check
          %p354 = pneg %p191
        $region70: #{tpu_custom_call.1} parent=55 // pred_check_branch
          %356 = sbr.rel (%p354) target = $region72
        $region71: #{tpu_custom_call.1} parent=55 // pred_region
          %358 = dma.done [#allocation8], 2048
        $region72: #{tpu_custom_call.1} parent=55 // pred_fallthru
          _
        %s359 = smul.u32 14, %s23
        %p360 = scmp.lt.s32.totalorder %s359, 55
        %s361 = scalar_select %p360, %s359, 55
        %s362 = smul.addr %s361, 4
        %s363 = scalar_lea.vmem %s0, %s362
        %p364 = pneg %p44
        %p365 = pneg %p41
        %p366 = pneg %p65
        %p367 = pneg %p62
        %p368 = pneg %p86
        %p369 = pneg %p83
        %p370 = pneg %p107
        %p371 = pneg %p104
        %p372 = pneg %p128
        %p373 = pneg %p125
        %p374 = pneg %p149
        %p375 = pneg %p146
        %p376 = pneg %p170
        %p377 = pneg %p167
        %p378 = pneg %p191
        %p379 = pneg %p188
        %p380 = pneg %p212
        %p381 = pneg %p209
        %p382 = pneg %p238
        %p383 = pneg %p235
        %s384 = smul.u32 14, %s23
        %p385 = scmp.lt.s32.totalorder %s384, 55
        %s386 = scalar_select %p385, %s384, 55
        %s387 = smul.addr %s386, 8
        %s388 = scalar_lea.vmem %s9, %s387
        %s389 = smul.u32 14, %s23
        %p390 = scmp.lt.s32.totalorder %s389, 55
        %s391 = scalar_select %p390, %s389, 55
        %s392 = smul.addr %s391, 4
        %s393 = scalar_lea.vmem %s0, %s392
        %s394 = smul.u32 14, %s23
        %s395 = smul.u32 14, %s23
        %p396 = scmp.lt.s32.totalorder %s395, 55
        %s397 = scalar_select %p396, %s395, 55
        %s398 = smul.addr %s397, 8
        %s399 = scalar_lea.vmem %s9, %s398
        %s400 = smul.u32 14, %s23
        %v402 = vld [vmem:[%s393] sm:$0xf]
        %v403 = vld [vmem:[%s393 + $0x4] sm:$0xf]
        %v404 = vld [vmem:[%s393 + $0x8] sm:$0xf]
        %v405 = vld [vmem:[%s393 + $0xc] sm:$0xf]
        %v406 = vld [vmem:[%s393 + $0x10] sm:$0xf]
        %v407 = vld [vmem:[%s393 + $0x14] sm:$0xf]
        %v408 = vld [vmem:[%s393 + $0x18] sm:$0xf]
        %v409 = vld [vmem:[%s393 + $0x1c] sm:$0xf]
        %v410 = vld [vmem:[%s393 + $0x20] sm:$0xf]
        %v411 = vld [vmem:[%s393 + $0x24] sm:$0xf]
        %v412 = vld [vmem:[%s393 + $0x28] sm:$0xf]
        %v413 = vld [vmem:[%s393 + $0x2c] sm:$0xf]
        %v414 = vld [vmem:[%s393 + $0x30] sm:$0xf]
        %v415 = vld [vmem:[%s393 + $0x34] sm:$0xf]
        %v416 = vld [vmem:[#allocation2] sm:$0xff]
        %v417 = vld [vmem:[#allocation2 + $0x8] sm:$0xff]
        %v418 = vld [vmem:[%s2] sm:$0x3]
        %v420 = vperm.slane %v418, 0
        %v421 = vperm.slane %v418, 1
        %v438 = vunpack.c.l.b16 %v402
        %v439 = vunpack.c.l.b16 %v403
        %v440 = vunpack.c.l.b16 %v404
        %v441 = vunpack.c.l.b16 %v405
        %v442 = vunpack.c.l.b16 %v406
        %v443 = vunpack.c.l.b16 %v407
        %v444 = vunpack.c.l.b16 %v408
        %v445 = vunpack.c.l.b16 %v409
        %v446 = vunpack.c.l.b16 %v410
        %v447 = vunpack.c.l.b16 %v411
        %v448 = vunpack.c.l.b16 %v412
        %v449 = vunpack.c.l.b16 %v413
        %v450 = vunpack.c.l.b16 %v414
        %v451 = vunpack.c.l.b16 %v415
        %v452 = vpack.c.b16 %v439, %v438
        %v453 = vpack.c.b16 %v441, %v440
        %v454 = vpack.c.b16 %v443, %v442
        %v455 = vpack.c.b16 %v445, %v444
        %v456 = vpack.c.b16 %v447, %v446
        %v457 = vpack.c.b16 %v449, %v448
        %v458 = vpack.c.b16 %v451, %v450
        %v461 = vunpack.c.l.b16 %v416
        %v462 = vunpack.c.h.b16 %v416
        %v463 = vunpack.c.l.b16 %v417
        %v464 = vunpack.c.h.b16 %v417
        %v465 = vpack.c.b16 %v463, %v461
        %v466 = vpack.c.b16 %v464, %v462
        %vm469 = vcmask 130048
        %v471 = vsel %vm469, %v452, 0
        %v474 = vsel %vm469, %v453, 0
        %v477 = vsel %vm469, %v454, 0
        %v480 = vsel %vm469, %v455, 0
        %v483 = vsel %vm469, %v456, 0
        %v486 = vsel %vm469, %v457, 0
        %v489 = vsel %vm469, %v458, 0
        %491 = vmatpush.bf16.msra.mxu0 0
        %492 = vmatpush.bf16.msra.mxu0 0
        %493 = vmatpush.bf16.msra.mxu0 0
        %494 = vmatpush.bf16.msra.mxu0 0
        %495 = vmatpush.bf16.msra.mxu0 0
        %496 = vmatpush.bf16.msra.mxu0 0
        %497 = vmatpush.bf16.msra.mxu0 0
        %498 = vmatpush.bf16.msra.mxu0 %v465
        %499 = vmatmul.bf16.gmra.mxu0 %v471
        %v500 = vpop.f32.mrf.mxu0
        %v501 = vadd.f32 %v420, %v500
        %v502 = vpop.f32.mrf.mxu0
        %v503 = vadd.f32 %v420, %v502
        %504 = vmatmul.bf16.gmra.mxu0 %v474
        %v505 = vpop.f32.mrf.mxu0
        %v506 = vadd.f32 %v420, %v505
        %v507 = vpop.f32.mrf.mxu0
        %v508 = vadd.f32 %v420, %v507
        %509 = vmatmul.bf16.gmra.mxu0 %v477
        %v510 = vpop.f32.mrf.mxu0
        %v511 = vadd.f32 %v420, %v510
        %v512 = vpop.f32.mrf.mxu0
        %v513 = vadd.f32 %v420, %v512
        %514 = vmatmul.bf16.gmra.mxu0 %v480
        %v515 = vpop.f32.mrf.mxu0
        %v516 = vadd.f32 %v420, %v515
        %v517 = vpop.f32.mrf.mxu0
        %v518 = vadd.f32 %v420, %v517
        %519 = vmatmul.bf16.gmra.mxu0 %v483
        %v520 = vpop.f32.mrf.mxu0
        %v521 = vadd.f32 %v420, %v520
        %v522 = vpop.f32.mrf.mxu0
        %v523 = vadd.f32 %v420, %v522
        %524 = vmatmul.bf16.gmra.mxu0 %v486
        %v525 = vpop.f32.mrf.mxu0
        %v526 = vadd.f32 %v420, %v525
        %v527 = vpop.f32.mrf.mxu0
        %v528 = vadd.f32 %v420, %v527
        %529 = vmatmul.bf16.gmra.mxu0 %v489
        %v530 = vpop.f32.mrf.mxu0
        %v531 = vadd.f32 %v420, %v530
        %v532 = vpop.f32.mrf.mxu0
        %v533 = vadd.f32 %v420, %v532
        %534 = vdwg.mxu0
        %535 = vmatpush.bf16.msra.mxu0 0
        %536 = vmatpush.bf16.msra.mxu0 0
        %537 = vmatpush.bf16.msra.mxu0 0
        %538 = vmatpush.bf16.msra.mxu0 0
        %539 = vmatpush.bf16.msra.mxu0 0
        %540 = vmatpush.bf16.msra.mxu0 0
        %541 = vmatpush.bf16.msra.mxu0 0
        %542 = vmatpush.bf16.msra.mxu0 %v466
        %543 = vmatmul.bf16.gmra.mxu0 %v471
        %v544 = vpop.f32.mrf.mxu0
        %v545 = vadd.f32 %v421, %v544
        %v546 = vpop.f32.mrf.mxu0
        %v547 = vadd.f32 %v421, %v546
        %548 = vmatmul.bf16.gmra.mxu0 %v474
        %v549 = vpop.f32.mrf.mxu0
        %v550 = vadd.f32 %v421, %v549
        %v551 = vpop.f32.mrf.mxu0
        %v552 = vadd.f32 %v421, %v551
        %553 = vmatmul.bf16.gmra.mxu0 %v477
        %v554 = vpop.f32.mrf.mxu0
        %v555 = vadd.f32 %v421, %v554
        %v556 = vpop.f32.mrf.mxu0
        %v557 = vadd.f32 %v421, %v556
        %558 = vmatmul.bf16.gmra.mxu0 %v480
        %v559 = vpop.f32.mrf.mxu0
        %v560 = vadd.f32 %v421, %v559
        %v561 = vpop.f32.mrf.mxu0
        %v562 = vadd.f32 %v421, %v561
        %563 = vmatmul.bf16.gmra.mxu0 %v483
        %v564 = vpop.f32.mrf.mxu0
        %v565 = vadd.f32 %v421, %v564
        %v566 = vpop.f32.mrf.mxu0
        %v567 = vadd.f32 %v421, %v566
        %568 = vmatmul.bf16.gmra.mxu0 %v486
        %v569 = vpop.f32.mrf.mxu0
        %v570 = vadd.f32 %v421, %v569
        %v571 = vpop.f32.mrf.mxu0
        %v572 = vadd.f32 %v421, %v571
        %573 = vmatmul.bf16.gmra.mxu0 %v489
        %v574 = vpop.f32.mrf.mxu0
        %v575 = vadd.f32 %v421, %v574
        %v576 = vpop.f32.mrf.mxu0
        %v577 = vadd.f32 %v421, %v576
        %578 = vdwg.mxu0
        %v579 = vpack.c.bf16 %v545, %v501
        %v580 = vpack.c.bf16 %v547, %v503
        %v581 = vpack.c.bf16 %v550, %v506
        %v582 = vpack.c.bf16 %v552, %v508
        %v583 = vpack.c.bf16 %v555, %v511
        %v584 = vpack.c.bf16 %v557, %v513
        %v585 = vpack.c.bf16 %v560, %v516
        %v586 = vpack.c.bf16 %v562, %v518
        %v587 = vpack.c.bf16 %v565, %v521
        %v588 = vpack.c.bf16 %v567, %v523
        %v589 = vpack.c.bf16 %v570, %v526
        %v590 = vpack.c.bf16 %v572, %v528
        %v591 = vpack.c.bf16 %v575, %v531
        %v592 = vpack.c.bf16 %v577, %v533
        %v593 = vunpack.c.l.bf16 %v579
        %v594 = vunpack.c.h.bf16 %v579
        %v595 = vunpack.c.l.bf16 %v580
        %v596 = vunpack.c.h.bf16 %v580
        %v597 = vunpack.c.l.bf16 %v581
        %v598 = vunpack.c.h.bf16 %v581
        %v599 = vunpack.c.l.bf16 %v582
        %v600 = vunpack.c.h.bf16 %v582
        %v601 = vunpack.c.l.bf16 %v583
        %v602 = vunpack.c.h.bf16 %v583
        %v603 = vunpack.c.l.bf16 %v584
        %v604 = vunpack.c.h.bf16 %v584
        %v605 = vunpack.c.l.bf16 %v585
        %v606 = vunpack.c.h.bf16 %v585
        %v607 = vunpack.c.l.bf16 %v586
        %v608 = vunpack.c.h.bf16 %v586
        %v609 = vunpack.c.l.bf16 %v587
        %v610 = vunpack.c.h.bf16 %v587
        %v611 = vunpack.c.l.bf16 %v588
        %v612 = vunpack.c.h.bf16 %v588
        %v613 = vunpack.c.l.bf16 %v589
        %v614 = vunpack.c.h.bf16 %v589
        %v615 = vunpack.c.l.bf16 %v590
        %v616 = vunpack.c.h.bf16 %v590
        %v617 = vunpack.c.l.bf16 %v591
        %v618 = vunpack.c.h.bf16 %v591
        %v619 = vunpack.c.l.bf16 %v592
        %v620 = vunpack.c.h.bf16 %v592
        %vm621 = vcmp.gt.f32.partialorder %v593, 0.0
        %vm622 = vcmp.gt.f32.partialorder %v594, 0.0
        %vm623 = vcmp.gt.f32.partialorder %v595, 0.0
        %vm624 = vcmp.gt.f32.partialorder %v596, 0.0
        %vm625 = vcmp.gt.f32.partialorder %v597, 0.0
        %vm626 = vcmp.gt.f32.partialorder %v598, 0.0
        %vm627 = vcmp.gt.f32.partialorder %v599, 0.0
        %vm628 = vcmp.gt.f32.partialorder %v600, 0.0
        %vm629 = vcmp.gt.f32.partialorder %v601, 0.0
        %vm630 = vcmp.gt.f32.partialorder %v602, 0.0
        %vm631 = vcmp.gt.f32.partialorder %v603, 0.0
        %vm632 = vcmp.gt.f32.partialorder %v604, 0.0
        %vm633 = vcmp.gt.f32.partialorder %v605, 0.0
        %vm634 = vcmp.gt.f32.partialorder %v606, 0.0
        %vm635 = vcmp.gt.f32.partialorder %v607, 0.0
        %vm636 = vcmp.gt.f32.partialorder %v608, 0.0
        %vm637 = vcmp.gt.f32.partialorder %v609, 0.0
        %vm638 = vcmp.gt.f32.partialorder %v610, 0.0
        %vm639 = vcmp.gt.f32.partialorder %v611, 0.0
        %vm640 = vcmp.gt.f32.partialorder %v612, 0.0
        %vm641 = vcmp.gt.f32.partialorder %v613, 0.0
        %vm642 = vcmp.gt.f32.partialorder %v614, 0.0
        %vm643 = vcmp.gt.f32.partialorder %v615, 0.0
        %vm644 = vcmp.gt.f32.partialorder %v616, 0.0
        %vm645 = vcmp.gt.f32.partialorder %v617, 0.0
        %vm646 = vcmp.gt.f32.partialorder %v618, 0.0
        %vm647 = vcmp.gt.f32.partialorder %v619, 0.0
        %vm648 = vcmp.gt.f32.partialorder %v620, 0.0
        %v649 = vmin.f32 %v593, 0.0
        %v650 = vmin.f32 %v594, 0.0
        %v651 = vmin.f32 %v595, 0.0
        %v652 = vmin.f32 %v596, 0.0
        %v653 = vmin.f32 %v597, 0.0
        %v654 = vmin.f32 %v598, 0.0
        %v655 = vmin.f32 %v599, 0.0
        %v656 = vmin.f32 %v600, 0.0
        %v657 = vmin.f32 %v601, 0.0
        %v658 = vmin.f32 %v602, 0.0
        %v659 = vmin.f32 %v603, 0.0
        %v660 = vmin.f32 %v604, 0.0
        %v661 = vmin.f32 %v605, 0.0
        %v662 = vmin.f32 %v606, 0.0
        %v663 = vmin.f32 %v607, 0.0
        %v664 = vmin.f32 %v608, 0.0
        %v665 = vmin.f32 %v609, 0.0
        %v666 = vmin.f32 %v610, 0.0
        %v667 = vmin.f32 %v611, 0.0
        %v668 = vmin.f32 %v612, 0.0
        %v669 = vmin.f32 %v613, 0.0
        %v670 = vmin.f32 %v614, 0.0
        %v671 = vmin.f32 %v615, 0.0
        %v672 = vmin.f32 %v616, 0.0
        %v673 = vmin.f32 %v617, 0.0
        %v674 = vmin.f32 %v618, 0.0
        %v675 = vmin.f32 %v619, 0.0
        %v676 = vmin.f32 %v620, 0.0
        %v677 = vpack.c.bf16 %v650, %v649
        %v678 = vpack.c.bf16 %v652, %v651
        %v679 = vpack.c.bf16 %v654, %v653
        %v680 = vpack.c.bf16 %v656, %v655
        %v681 = vpack.c.bf16 %v658, %v657
        %v682 = vpack.c.bf16 %v660, %v659
        %v683 = vpack.c.bf16 %v662, %v661
        %v684 = vpack.c.bf16 %v664, %v663
        %v685 = vpack.c.bf16 %v666, %v665
        %v686 = vpack.c.bf16 %v668, %v667
        %v687 = vpack.c.bf16 %v670, %v669
        %v688 = vpack.c.bf16 %v672, %v671
        %v689 = vpack.c.bf16 %v674, %v673
        %v690 = vpack.c.bf16 %v676, %v675
        %v691 = vunpack.c.l.bf16 %v677
        %v692 = vunpack.c.h.bf16 %v677
        %v693 = vunpack.c.l.bf16 %v678
        %v694 = vunpack.c.h.bf16 %v678
        %v695 = vunpack.c.l.bf16 %v679
        %v696 = vunpack.c.h.bf16 %v679
        %v697 = vunpack.c.l.bf16 %v680
        %v698 = vunpack.c.h.bf16 %v680
        %v699 = vunpack.c.l.bf16 %v681
        %v700 = vunpack.c.h.bf16 %v681
        %v701 = vunpack.c.l.bf16 %v682
        %v702 = vunpack.c.h.bf16 %v682
        %v703 = vunpack.c.l.bf16 %v683
        %v704 = vunpack.c.h.bf16 %v683
        %v705 = vunpack.c.l.bf16 %v684
        %v706 = vunpack.c.h.bf16 %v684
        %v707 = vunpack.c.l.bf16 %v685
        %v708 = vunpack.c.h.bf16 %v685
        %v709 = vunpack.c.l.bf16 %v686
        %v710 = vunpack.c.h.bf16 %v686
        %v711 = vunpack.c.l.bf16 %v687
        %v712 = vunpack.c.h.bf16 %v687
        %v713 = vunpack.c.l.bf16 %v688
        %v714 = vunpack.c.h.bf16 %v688
        %v715 = vunpack.c.l.bf16 %v689
        %v716 = vunpack.c.h.bf16 %v689
        %v717 = vunpack.c.l.bf16 %v690
        %v718 = vunpack.c.h.bf16 %v690
        %v719 = vmul.f32 %v691, 1.442695
        %v720 = vpow.pop %v719
        %v721 = vmul.f32 %v692, 1.442695
        %v722 = vpow.pop %v721
        %v723 = vmul.f32 %v693, 1.442695
        %v724 = vpow.pop %v723
        %v725 = vmul.f32 %v694, 1.442695
        %v726 = vpow.pop %v725
        %v727 = vmul.f32 %v695, 1.442695
        %v728 = vpow.pop %v727
        %v729 = vmul.f32 %v696, 1.442695
        %v730 = vpow.pop %v729
        %v731 = vmul.f32 %v697, 1.442695
        %v732 = vpow.pop %v731
        %v733 = vmul.f32 %v698, 1.442695
        %v734 = vpow.pop %v733
        %v735 = vmul.f32 %v699, 1.442695
        %v736 = vpow.pop %v735
        %v737 = vmul.f32 %v700, 1.442695
        %v738 = vpow.pop %v737
        %v739 = vmul.f32 %v701, 1.442695
        %v740 = vpow.pop %v739
        %v741 = vmul.f32 %v702, 1.442695
        %v742 = vpow.pop %v741
        %v743 = vmul.f32 %v703, 1.442695
        %v744 = vpow.pop %v743
        %v745 = vmul.f32 %v704, 1.442695
        %v746 = vpow.pop %v745
        %v747 = vmul.f32 %v705, 1.442695
        %v748 = vpow.pop %v747
        %v749 = vmul.f32 %v706, 1.442695
        %v750 = vpow.pop %v749
        %v751 = vmul.f32 %v707, 1.442695
        %v752 = vpow.pop %v751
        %v753 = vmul.f32 %v708, 1.442695
        %v754 = vpow.pop %v753
        %v755 = vmul.f32 %v709, 1.442695
        %v756 = vpow.pop %v755
        %v757 = vmul.f32 %v710, 1.442695
        %v758 = vpow.pop %v757
        %v759 = vmul.f32 %v711, 1.442695
        %v760 = vpow.pop %v759
        %v761 = vmul.f32 %v712, 1.442695
        %v762 = vpow.pop %v761
        %v763 = vmul.f32 %v713, 1.442695
        %v764 = vpow.pop %v763
        %v765 = vmul.f32 %v714, 1.442695
        %v766 = vpow.pop %v765
        %v767 = vmul.f32 %v715, 1.442695
        %v768 = vpow.pop %v767
        %v769 = vmul.f32 %v716, 1.442695
        %v770 = vpow.pop %v769
        %v771 = vmul.f32 %v717, 1.442695
        %v772 = vpow.pop %v771
        %v773 = vmul.f32 %v718, 1.442695
        %v774 = vpow.pop %v773
        %v775 = vpack.c.bf16 %v722, %v720
        %v776 = vpack.c.bf16 %v726, %v724
        %v777 = vpack.c.bf16 %v730, %v728
        %v778 = vpack.c.bf16 %v734, %v732
        %v779 = vpack.c.bf16 %v738, %v736
        %v780 = vpack.c.bf16 %v742, %v740
        %v781 = vpack.c.bf16 %v746, %v744
        %v782 = vpack.c.bf16 %v750, %v748
        %v783 = vpack.c.bf16 %v754, %v752
        %v784 = vpack.c.bf16 %v758, %v756
        %v785 = vpack.c.bf16 %v762, %v760
        %v786 = vpack.c.bf16 %v766, %v764
        %v787 = vpack.c.bf16 %v770, %v768
        %v788 = vpack.c.bf16 %v774, %v772
        %v789 = vunpack.c.l.bf16 %v775
        %v790 = vunpack.c.h.bf16 %v775
        %v791 = vunpack.c.l.bf16 %v776
        %v792 = vunpack.c.h.bf16 %v776
        %v793 = vunpack.c.l.bf16 %v777
        %v794 = vunpack.c.h.bf16 %v777
        %v795 = vunpack.c.l.bf16 %v778
        %v796 = vunpack.c.h.bf16 %v778
        %v797 = vunpack.c.l.bf16 %v779
        %v798 = vunpack.c.h.bf16 %v779
        %v799 = vunpack.c.l.bf16 %v780
        %v800 = vunpack.c.h.bf16 %v780
        %v801 = vunpack.c.l.bf16 %v781
        %v802 = vunpack.c.h.bf16 %v781
        %v803 = vunpack.c.l.bf16 %v782
        %v804 = vunpack.c.h.bf16 %v782
        %v805 = vunpack.c.l.bf16 %v783
        %v806 = vunpack.c.h.bf16 %v783
        %v807 = vunpack.c.l.bf16 %v784
        %v808 = vunpack.c.h.bf16 %v784
        %v809 = vunpack.c.l.bf16 %v785
        %v810 = vunpack.c.h.bf16 %v785
        %v811 = vunpack.c.l.bf16 %v786
        %v812 = vunpack.c.h.bf16 %v786
        %v813 = vunpack.c.l.bf16 %v787
        %v814 = vunpack.c.h.bf16 %v787
        %v815 = vunpack.c.l.bf16 %v788
        %v816 = vunpack.c.h.bf16 %v788
        %v817 = vsub.f32 %v789, 1.0
        %v818 = vsub.f32 %v790, 1.0
        %v819 = vsub.f32 %v791, 1.0
        %v820 = vsub.f32 %v792, 1.0
        %v821 = vsub.f32 %v793, 1.0
        %v822 = vsub.f32 %v794, 1.0
        %v823 = vsub.f32 %v795, 1.0
        %v824 = vsub.f32 %v796, 1.0
        %v825 = vsub.f32 %v797, 1.0
        %v826 = vsub.f32 %v798, 1.0
        %v827 = vsub.f32 %v799, 1.0
        %v828 = vsub.f32 %v800, 1.0
        %v829 = vsub.f32 %v801, 1.0
        %v830 = vsub.f32 %v802, 1.0
        %v831 = vsub.f32 %v803, 1.0
        %v832 = vsub.f32 %v804, 1.0
        %v833 = vsub.f32 %v805, 1.0
        %v834 = vsub.f32 %v806, 1.0
        %v835 = vsub.f32 %v807, 1.0
        %v836 = vsub.f32 %v808, 1.0
        %v837 = vsub.f32 %v809, 1.0
        %v838 = vsub.f32 %v810, 1.0
        %v839 = vsub.f32 %v811, 1.0
        %v840 = vsub.f32 %v812, 1.0
        %v841 = vsub.f32 %v813, 1.0
        %v842 = vsub.f32 %v814, 1.0
        %v843 = vsub.f32 %v815, 1.0
        %v844 = vsub.f32 %v816, 1.0
        %v845 = vpack.c.bf16 %v818, %v817
        %v846 = vpack.c.bf16 %v820, %v819
        %v847 = vpack.c.bf16 %v822, %v821
        %v848 = vpack.c.bf16 %v824, %v823
        %v849 = vpack.c.bf16 %v826, %v825
        %v850 = vpack.c.bf16 %v828, %v827
        %v851 = vpack.c.bf16 %v830, %v829
        %v852 = vpack.c.bf16 %v832, %v831
        %v853 = vpack.c.bf16 %v834, %v833
        %v854 = vpack.c.bf16 %v836, %v835
        %v855 = vpack.c.bf16 %v838, %v837
        %v856 = vpack.c.bf16 %v840, %v839
        %v857 = vpack.c.bf16 %v842, %v841
        %v858 = vpack.c.bf16 %v844, %v843
        %vm859 = vmpackc.low %vm622, %vm621
        %vm860 = vmpackc.low %vm624, %vm623
        %vm861 = vmpackc.low %vm626, %vm625
        %vm862 = vmpackc.low %vm628, %vm627
        %vm863 = vmpackc.low %vm630, %vm629
        %vm864 = vmpackc.low %vm632, %vm631
        %vm865 = vmpackc.low %vm634, %vm633
        %vm866 = vmpackc.low %vm636, %vm635
        %vm867 = vmpackc.low %vm638, %vm637
        %vm868 = vmpackc.low %vm640, %vm639
        %vm869 = vmpackc.low %vm642, %vm641
        %vm870 = vmpackc.low %vm644, %vm643
        %vm871 = vmpackc.low %vm646, %vm645
        %vm872 = vmpackc.low %vm648, %vm647
        %v873 = vsel %vm859, %v579, %v845
        %v874 = vsel %vm860, %v580, %v846
        %v875 = vsel %vm861, %v581, %v847
        %v876 = vsel %vm862, %v582, %v848
        %v877 = vsel %vm863, %v583, %v849
        %v878 = vsel %vm864, %v584, %v850
        %v879 = vsel %vm865, %v585, %v851
        %v880 = vsel %vm866, %v586, %v852
        %v881 = vsel %vm867, %v587, %v853
        %v882 = vsel %vm868, %v588, %v854
        %v883 = vsel %vm869, %v589, %v855
        %v884 = vsel %vm870, %v590, %v856
        %v885 = vsel %vm871, %v591, %v857
        %v886 = vsel %vm872, %v592, %v858
        %v887 = vld [vmem:[%s3] sm:$0xff]
        %v888 = vld [vmem:[%s3 + $0x8] sm:$0xff]
        %v889 = vld [vmem:[%s3 + $0x10] sm:$0xff]
        %v890 = vld [vmem:[%s3 + $0x18] sm:$0xff]
        %v891 = vld [vmem:[%s3 + $0x20] sm:$0xff]
        %v892 = vld [vmem:[%s3 + $0x28] sm:$0xff]
        %v893 = vld [vmem:[%s3 + $0x30] sm:$0xff]
        %v894 = vld [vmem:[%s3 + $0x38] sm:$0xff]
        %v895 = vld [vmem:[%s3 + $0x40] sm:$0xff]
        %v896 = vld [vmem:[%s3 + $0x48] sm:$0xff]
        %v897 = vld [vmem:[%s3 + $0x50] sm:$0xff]
        %v898 = vld [vmem:[%s3 + $0x58] sm:$0xff]
        %v899 = vld [vmem:[%s3 + $0x60] sm:$0xff]
        %v900 = vld [vmem:[%s3 + $0x68] sm:$0xff]
        %v901 = vld [vmem:[%s3 + $0x70] sm:$0xff]
        %v902 = vld [vmem:[%s3 + $0x78] sm:$0xff]
        %v903 = vld [vmem:[%s3 + $0x80] sm:$0xff]
        %v904 = vld [vmem:[%s3 + $0x88] sm:$0xff]
        %v905 = vld [vmem:[%s3 + $0x90] sm:$0xff]
        %v906 = vld [vmem:[%s3 + $0x98] sm:$0xff]
        %v907 = vld [vmem:[%s3 + $0xa0] sm:$0xff]
        %v908 = vld [vmem:[%s3 + $0xa8] sm:$0xff]
        %v909 = vld [vmem:[%s3 + $0xb0] sm:$0xff]
        %v910 = vld [vmem:[%s3 + $0xb8] sm:$0xff]
        %v911 = vld [vmem:[%s3 + $0xc0] sm:$0xff]
        %v912 = vld [vmem:[%s3 + $0xc8] sm:$0xff]
        %v913 = vld [vmem:[%s3 + $0xd0] sm:$0xff]
        %v914 = vld [vmem:[%s3 + $0xd8] sm:$0xff]
        %v915 = vld [vmem:[%s3 + $0xe0] sm:$0xff]
        %v916 = vld [vmem:[%s3 + $0xe8] sm:$0xff]
        %v917 = vld [vmem:[%s3 + $0xf0] sm:$0xff]
        %v918 = vld [vmem:[%s3 + $0xf8] sm:$0xff]
        %v919 = vld [vmem:[#allocation4] sm:$0x3]
        %v921 = vperm.slane %v919, 0
        %v922 = vperm.slane %v919, 1
        %v939 = vunpack.c.l.b16 %v873
        %v940 = vunpack.c.h.b16 %v873
        %v941 = vunpack.c.l.b16 %v874
        %v942 = vunpack.c.h.b16 %v874
        %v943 = vunpack.c.l.b16 %v875
        %v944 = vunpack.c.h.b16 %v875
        %v945 = vunpack.c.l.b16 %v876
        %v946 = vunpack.c.h.b16 %v876
        %v947 = vunpack.c.l.b16 %v877
        %v948 = vunpack.c.h.b16 %v877
        %v949 = vunpack.c.l.b16 %v878
        %v950 = vunpack.c.h.b16 %v878
        %v951 = vunpack.c.l.b16 %v879
        %v952 = vunpack.c.h.b16 %v879
        %v953 = vunpack.c.l.b16 %v880
        %v954 = vunpack.c.h.b16 %v880
        %v955 = vunpack.c.l.b16 %v881
        %v956 = vunpack.c.h.b16 %v881
        %v957 = vunpack.c.l.b16 %v882
        %v958 = vunpack.c.h.b16 %v882
        %v959 = vunpack.c.l.b16 %v883
        %v960 = vunpack.c.h.b16 %v883
        %v961 = vunpack.c.l.b16 %v884
        %v962 = vunpack.c.h.b16 %v884
        %v963 = vunpack.c.l.b16 %v885
        %v964 = vunpack.c.h.b16 %v885
        %v965 = vunpack.c.l.b16 %v886
        %v966 = vunpack.c.h.b16 %v886
        %v967 = vpack.c.b16 %v941, %v939
        %v968 = vpack.c.b16 %v942, %v940
        %v969 = vpack.c.b16 %v945, %v943
        %v970 = vpack.c.b16 %v946, %v944
        %v971 = vpack.c.b16 %v949, %v947
        %v972 = vpack.c.b16 %v950, %v948
        %v973 = vpack.c.b16 %v953, %v951
        %v974 = vpack.c.b16 %v954, %v952
        %v975 = vpack.c.b16 %v957, %v955
        %v976 = vpack.c.b16 %v958, %v956
        %v977 = vpack.c.b16 %v961, %v959
        %v978 = vpack.c.b16 %v962, %v960
        %v979 = vpack.c.b16 %v965, %v963
        %v980 = vpack.c.b16 %v966, %v964
        %v1027 = vunpack.c.l.b16 %v887
        %v1028 = vunpack.c.h.b16 %v887
        %v1029 = vunpack.c.l.b16 %v888
        %v1030 = vunpack.c.h.b16 %v888
        %v1031 = vunpack.c.l.b16 %v889
        %v1032 = vunpack.c.h.b16 %v889
        %v1033 = vunpack.c.l.b16 %v890
        %v1034 = vunpack.c.h.b16 %v890
        %v1035 = vunpack.c.l.b16 %v891
        %v1036 = vunpack.c.h.b16 %v891
        %v1037 = vunpack.c.l.b16 %v892
        %v1038 = vunpack.c.h.b16 %v892
        %v1039 = vunpack.c.l.b16 %v893
        %v1040 = vunpack.c.h.b16 %v893
        %v1041 = vunpack.c.l.b16 %v894
        %v1042 = vunpack.c.h.b16 %v894
        %v1043 = vunpack.c.l.b16 %v895
        %v1044 = vunpack.c.h.b16 %v895
        %v1045 = vunpack.c.l.b16 %v896
        %v1046 = vunpack.c.h.b16 %v896
        %v1047 = vunpack.c.l.b16 %v897
        %v1048 = vunpack.c.h.b16 %v897
        %v1049 = vunpack.c.l.b16 %v898
        %v1050 = vunpack.c.h.b16 %v898
        %v1051 = vunpack.c.l.b16 %v899
        %v1052 = vunpack.c.h.b16 %v899
        %v1053 = vunpack.c.l.b16 %v900
        %v1054 = vunpack.c.h.b16 %v900
        %v1055 = vunpack.c.l.b16 %v901
        %v1056 = vunpack.c.h.b16 %v901
        %v1057 = vunpack.c.l.b16 %v902
        %v1058 = vunpack.c.h.b16 %v902
        %v1059 = vunpack.c.l.b16 %v903
        %v1060 = vunpack.c.h.b16 %v903
        %v1061 = vunpack.c.l.b16 %v904
        %v1062 = vunpack.c.h.b16 %v904
        %v1063 = vunpack.c.l.b16 %v905
        %v1064 = vunpack.c.h.b16 %v905
        %v1065 = vunpack.c.l.b16 %v906
        %v1066 = vunpack.c.h.b16 %v906
        %v1067 = vunpack.c.l.b16 %v907
        %v1068 = vunpack.c.h.b16 %v907
        %v1069 = vunpack.c.l.b16 %v908
        %v1070 = vunpack.c.h.b16 %v908
        %v1071 = vunpack.c.l.b16 %v909
        %v1072 = vunpack.c.h.b16 %v909
        %v1073 = vunpack.c.l.b16 %v910
        %v1074 = vunpack.c.h.b16 %v910
        %v1075 = vunpack.c.l.b16 %v911
        %v1076 = vunpack.c.h.b16 %v911
        %v1077 = vunpack.c.l.b16 %v912
        %v1078 = vunpack.c.h.b16 %v912
        %v1079 = vunpack.c.l.b16 %v913
        %v1080 = vunpack.c.h.b16 %v913
        %v1081 = vunpack.c.l.b16 %v914
        %v1082 = vunpack.c.h.b16 %v914
        %v1083 = vunpack.c.l.b16 %v915
        %v1084 = vunpack.c.h.b16 %v915
        %v1085 = vunpack.c.l.b16 %v916
        %v1086 = vunpack.c.h.b16 %v916
        %v1087 = vunpack.c.l.b16 %v917
        %v1088 = vunpack.c.h.b16 %v917
        %v1089 = vunpack.c.l.b16 %v918
        %v1090 = vunpack.c.h.b16 %v918
        %v1091 = vpack.c.b16 %v1029, %v1027
        %v1092 = vpack.c.b16 %v1030, %v1028
        %v1093 = vpack.c.b16 %v1033, %v1031
        %v1094 = vpack.c.b16 %v1034, %v1032
        %v1095 = vpack.c.b16 %v1037, %v1035
        %v1096 = vpack.c.b16 %v1038, %v1036
        %v1097 = vpack.c.b16 %v1041, %v1039
        %v1098 = vpack.c.b16 %v1042, %v1040
        %v1099 = vpack.c.b16 %v1045, %v1043
        %v1100 = vpack.c.b16 %v1046, %v1044
        %v1101 = vpack.c.b16 %v1049, %v1047
        %v1102 = vpack.c.b16 %v1050, %v1048
        %v1103 = vpack.c.b16 %v1053, %v1051
        %v1104 = vpack.c.b16 %v1054, %v1052
        %v1105 = vpack.c.b16 %v1057, %v1055
        %v1106 = vpack.c.b16 %v1058, %v1056
        %v1107 = vpack.c.b16 %v1061, %v1059
        %v1108 = vpack.c.b16 %v1062, %v1060
        %v1109 = vpack.c.b16 %v1065, %v1063
        %v1110 = vpack.c.b16 %v1066, %v1064
        %v1111 = vpack.c.b16 %v1069, %v1067
        %v1112 = vpack.c.b16 %v1070, %v1068
        %v1113 = vpack.c.b16 %v1073, %v1071
        %v1114 = vpack.c.b16 %v1074, %v1072
        %v1115 = vpack.c.b16 %v1077, %v1075
        %v1116 = vpack.c.b16 %v1078, %v1076
        %v1117 = vpack.c.b16 %v1081, %v1079
        %v1118 = vpack.c.b16 %v1082, %v1080
        %v1119 = vpack.c.b16 %v1085, %v1083
        %v1120 = vpack.c.b16 %v1086, %v1084
        %v1121 = vpack.c.b16 %v1089, %v1087
        %v1122 = vpack.c.b16 %v1090, %v1088
        %1155 = vmatpush.bf16.msra.mxu0 %v1105
        %1156 = vmatpush.bf16.msra.mxu0 %v1103
        %1157 = vmatpush.bf16.msra.mxu0 %v1101
        %1158 = vmatpush.bf16.msra.mxu0 %v1099
        %1159 = vmatpush.bf16.msra.mxu0 %v1097
        %1160 = vmatpush.bf16.msra.mxu0 %v1095
        %1161 = vmatpush.bf16.msra.mxu0 %v1093
        %1162 = vmatpush.bf16.msra.mxu0 %v1091
        %1163 = vmatmul.bf16.gmra.mxu0 %v967
        %v1164 = vpop.f32.mrf.mxu0
        %v1165 = vadd.f32 %v921, %v1164
        %v1166 = vpop.f32.mrf.mxu0
        %v1167 = vadd.f32 %v921, %v1166
        %1168 = vmatmul.bf16.gmra.mxu0 %v969
        %v1169 = vpop.f32.mrf.mxu0
        %v1170 = vadd.f32 %v921, %v1169
        %v1171 = vpop.f32.mrf.mxu0
        %v1172 = vadd.f32 %v921, %v1171
        %1173 = vmatmul.bf16.gmra.mxu0 %v971
        %v1174 = vpop.f32.mrf.mxu0
        %v1175 = vadd.f32 %v921, %v1174
        %v1176 = vpop.f32.mrf.mxu0
        %v1177 = vadd.f32 %v921, %v1176
        %1178 = vmatmul.bf16.gmra.mxu0 %v973
        %v1179 = vpop.f32.mrf.mxu0
        %v1180 = vadd.f32 %v921, %v1179
        %v1181 = vpop.f32.mrf.mxu0
        %v1182 = vadd.f32 %v921, %v1181
        %1183 = vmatmul.bf16.gmra.mxu0 %v975
        %v1184 = vpop.f32.mrf.mxu0
        %v1185 = vadd.f32 %v921, %v1184
        %v1186 = vpop.f32.mrf.mxu0
        %v1187 = vadd.f32 %v921, %v1186
        %1188 = vmatmul.bf16.gmra.mxu0 %v977
        %v1189 = vpop.f32.mrf.mxu0
        %v1190 = vadd.f32 %v921, %v1189
        %v1191 = vpop.f32.mrf.mxu0
        %v1192 = vadd.f32 %v921, %v1191
        %1193 = vmatmul.bf16.gmra.mxu0 %v979
        %v1194 = vpop.f32.mrf.mxu0
        %v1195 = vadd.f32 %v921, %v1194
        %v1196 = vpop.f32.mrf.mxu0
        %v1197 = vadd.f32 %v921, %v1196
        %1198 = vdwg.mxu0
        %1199 = vmatpush.bf16.msra.mxu0 %v1121
        %1200 = vmatpush.bf16.msra.mxu0 %v1119
        %1201 = vmatpush.bf16.msra.mxu0 %v1117
        %1202 = vmatpush.bf16.msra.mxu0 %v1115
        %1203 = vmatpush.bf16.msra.mxu0 %v1113
        %1204 = vmatpush.bf16.msra.mxu0 %v1111
        %1205 = vmatpush.bf16.msra.mxu0 %v1109
        %1206 = vmatpush.bf16.msra.mxu0 %v1107
        %1207 = vmatmul.bf16.gmra.mxu0 %v968
        %v1208 = vpop.f32.mrf.mxu0
        %v1209 = vadd.f32 %v1165, %v1208
        %v1210 = vpop.f32.mrf.mxu0
        %v1211 = vadd.f32 %v1167, %v1210
        %1212 = vmatmul.bf16.gmra.mxu0 %v970
        %v1213 = vpop.f32.mrf.mxu0
        %v1214 = vadd.f32 %v1170, %v1213
        %v1215 = vpop.f32.mrf.mxu0
        %v1216 = vadd.f32 %v1172, %v1215
        %1217 = vmatmul.bf16.gmra.mxu0 %v972
        %v1218 = vpop.f32.mrf.mxu0
        %v1219 = vadd.f32 %v1175, %v1218
        %v1220 = vpop.f32.mrf.mxu0
        %v1221 = vadd.f32 %v1177, %v1220
        %1222 = vmatmul.bf16.gmra.mxu0 %v974
        %v1223 = vpop.f32.mrf.mxu0
        %v1224 = vadd.f32 %v1180, %v1223
        %v1225 = vpop.f32.mrf.mxu0
        %v1226 = vadd.f32 %v1182, %v1225
        %1227 = vmatmul.bf16.gmra.mxu0 %v976
        %v1228 = vpop.f32.mrf.mxu0
        %v1229 = vadd.f32 %v1185, %v1228
        %v1230 = vpop.f32.mrf.mxu0
        %v1231 = vadd.f32 %v1187, %v1230
        %1232 = vmatmul.bf16.gmra.mxu0 %v978
        %v1233 = vpop.f32.mrf.mxu0
        %v1234 = vadd.f32 %v1190, %v1233
        %v1235 = vpop.f32.mrf.mxu0
        %v1236 = vadd.f32 %v1192, %v1235
        %1237 = vmatmul.bf16.gmra.mxu0 %v980
        %v1238 = vpop.f32.mrf.mxu0
        %v1239 = vadd.f32 %v1195, %v1238
        %v1240 = vpop.f32.mrf.mxu0
        %v1241 = vadd.f32 %v1197, %v1240
        %1242 = vdwg.mxu0
        %1243 = vmatpush.bf16.msra.mxu0 %v1106
        %1244 = vmatpush.bf16.msra.mxu0 %v1104
        %1245 = vmatpush.bf16.msra.mxu0 %v1102
        %1246 = vmatpush.bf16.msra.mxu0 %v1100
        %1247 = vmatpush.bf16.msra.mxu0 %v1098
        %1248 = vmatpush.bf16.msra.mxu0 %v1096
        %1249 = vmatpush.bf16.msra.mxu0 %v1094
        %1250 = vmatpush.bf16.msra.mxu0 %v1092
        %1251 = vmatmul.bf16.gmra.mxu0 %v967
        %v1252 = vpop.f32.mrf.mxu0
        %v1253 = vadd.f32 %v922, %v1252
        %v1254 = vpop.f32.mrf.mxu0
        %v1255 = vadd.f32 %v922, %v1254
        %1256 = vmatmul.bf16.gmra.mxu0 %v969
        %v1257 = vpop.f32.mrf.mxu0
        %v1258 = vadd.f32 %v922, %v1257
        %v1259 = vpop.f32.mrf.mxu0
        %v1260 = vadd.f32 %v922, %v1259
        %1261 = vmatmul.bf16.gmra.mxu0 %v971
        %v1262 = vpop.f32.mrf.mxu0
        %v1263 = vadd.f32 %v922, %v1262
        %v1264 = vpop.f32.mrf.mxu0
        %v1265 = vadd.f32 %v922, %v1264
        %1266 = vmatmul.bf16.gmra.mxu0 %v973
        %v1267 = vpop.f32.mrf.mxu0
        %v1268 = vadd.f32 %v922, %v1267
        %v1269 = vpop.f32.mrf.mxu0
        %v1270 = vadd.f32 %v922, %v1269
        %1271 = vmatmul.bf16.gmra.mxu0 %v975
        %v1272 = vpop.f32.mrf.mxu0
        %v1273 = vadd.f32 %v922, %v1272
        %v1274 = vpop.f32.mrf.mxu0
        %v1275 = vadd.f32 %v922, %v1274
        %1276 = vmatmul.bf16.gmra.mxu0 %v977
        %v1277 = vpop.f32.mrf.mxu0
        %v1278 = vadd.f32 %v922, %v1277
        %v1279 = vpop.f32.mrf.mxu0
        %v1280 = vadd.f32 %v922, %v1279
        %1281 = vmatmul.bf16.gmra.mxu0 %v979
        %v1282 = vpop.f32.mrf.mxu0
        %v1283 = vadd.f32 %v922, %v1282
        %v1284 = vpop.f32.mrf.mxu0
        %v1285 = vadd.f32 %v922, %v1284
        %1286 = vdwg.mxu0
        %1287 = vmatpush.bf16.msra.mxu0 %v1122
        %1288 = vmatpush.bf16.msra.mxu0 %v1120
        %1289 = vmatpush.bf16.msra.mxu0 %v1118
        %1290 = vmatpush.bf16.msra.mxu0 %v1116
        %1291 = vmatpush.bf16.msra.mxu0 %v1114
        %1292 = vmatpush.bf16.msra.mxu0 %v1112
        %1293 = vmatpush.bf16.msra.mxu0 %v1110
        %1294 = vmatpush.bf16.msra.mxu0 %v1108
        %1295 = vmatmul.bf16.gmra.mxu0 %v968
        %v1296 = vpop.f32.mrf.mxu0
        %v1297 = vadd.f32 %v1253, %v1296
        %v1298 = vpop.f32.mrf.mxu0
        %v1299 = vadd.f32 %v1255, %v1298
        %1300 = vmatmul.bf16.gmra.mxu0 %v970
        %v1301 = vpop.f32.mrf.mxu0
        %v1302 = vadd.f32 %v1258, %v1301
        %v1303 = vpop.f32.mrf.mxu0
        %v1304 = vadd.f32 %v1260, %v1303
        %1305 = vmatmul.bf16.gmra.mxu0 %v972
        %v1306 = vpop.f32.mrf.mxu0
        %v1307 = vadd.f32 %v1263, %v1306
        %v1308 = vpop.f32.mrf.mxu0
        %v1309 = vadd.f32 %v1265, %v1308
        %1310 = vmatmul.bf16.gmra.mxu0 %v974
        %v1311 = vpop.f32.mrf.mxu0
        %v1312 = vadd.f32 %v1268, %v1311
        %v1313 = vpop.f32.mrf.mxu0
        %v1314 = vadd.f32 %v1270, %v1313
        %1315 = vmatmul.bf16.gmra.mxu0 %v976
        %v1316 = vpop.f32.mrf.mxu0
        %v1317 = vadd.f32 %v1273, %v1316
        %v1318 = vpop.f32.mrf.mxu0
        %v1319 = vadd.f32 %v1275, %v1318
        %1320 = vmatmul.bf16.gmra.mxu0 %v978
        %v1321 = vpop.f32.mrf.mxu0
        %v1322 = vadd.f32 %v1278, %v1321
        %v1323 = vpop.f32.mrf.mxu0
        %v1324 = vadd.f32 %v1280, %v1323
        %1325 = vmatmul.bf16.gmra.mxu0 %v980
        %v1326 = vpop.f32.mrf.mxu0
        %v1327 = vadd.f32 %v1283, %v1326
        %v1328 = vpop.f32.mrf.mxu0
        %v1329 = vadd.f32 %v1285, %v1328
        %1330 = vdwg.mxu0
        %v1331 = vpack.c.bf16 %v1297, %v1209
        %v1332 = vpack.c.bf16 %v1299, %v1211
        %v1333 = vpack.c.bf16 %v1302, %v1214
        %v1334 = vpack.c.bf16 %v1304, %v1216
        %v1335 = vpack.c.bf16 %v1307, %v1219
        %v1336 = vpack.c.bf16 %v1309, %v1221
        %v1337 = vpack.c.bf16 %v1312, %v1224
        %v1338 = vpack.c.bf16 %v1314, %v1226
        %v1339 = vpack.c.bf16 %v1317, %v1229
        %v1340 = vpack.c.bf16 %v1319, %v1231
        %v1341 = vpack.c.bf16 %v1322, %v1234
        %v1342 = vpack.c.bf16 %v1324, %v1236
        %v1343 = vpack.c.bf16 %v1327, %v1239
        %v1344 = vpack.c.bf16 %v1329, %v1241
        %v1345 = vunpack.c.l.bf16 %v1331
        %v1346 = vunpack.c.h.bf16 %v1331
        %v1347 = vunpack.c.l.bf16 %v1332
        %v1348 = vunpack.c.h.bf16 %v1332
        %v1349 = vunpack.c.l.bf16 %v1333
        %v1350 = vunpack.c.h.bf16 %v1333
        %v1351 = vunpack.c.l.bf16 %v1334
        %v1352 = vunpack.c.h.bf16 %v1334
        %v1353 = vunpack.c.l.bf16 %v1335
        %v1354 = vunpack.c.h.bf16 %v1335
        %v1355 = vunpack.c.l.bf16 %v1336
        %v1356 = vunpack.c.h.bf16 %v1336
        %v1357 = vunpack.c.l.bf16 %v1337
        %v1358 = vunpack.c.h.bf16 %v1337
        %v1359 = vunpack.c.l.bf16 %v1338
        %v1360 = vunpack.c.h.bf16 %v1338
        %v1361 = vunpack.c.l.bf16 %v1339
        %v1362 = vunpack.c.h.bf16 %v1339
        %v1363 = vunpack.c.l.bf16 %v1340
        %v1364 = vunpack.c.h.bf16 %v1340
        %v1365 = vunpack.c.l.bf16 %v1341
        %v1366 = vunpack.c.h.bf16 %v1341
        %v1367 = vunpack.c.l.bf16 %v1342
        %v1368 = vunpack.c.h.bf16 %v1342
        %v1369 = vunpack.c.l.bf16 %v1343
        %v1370 = vunpack.c.h.bf16 %v1343
        %v1371 = vunpack.c.l.bf16 %v1344
        %v1372 = vunpack.c.h.bf16 %v1344
        %vm1373 = vcmp.gt.f32.partialorder %v1345, 0.0
        %vm1374 = vcmp.gt.f32.partialorder %v1346, 0.0
        %vm1375 = vcmp.gt.f32.partialorder %v1347, 0.0
        %vm1376 = vcmp.gt.f32.partialorder %v1348, 0.0
        %vm1377 = vcmp.gt.f32.partialorder %v1349, 0.0
        %vm1378 = vcmp.gt.f32.partialorder %v1350, 0.0
        %vm1379 = vcmp.gt.f32.partialorder %v1351, 0.0
        %vm1380 = vcmp.gt.f32.partialorder %v1352, 0.0
        %vm1381 = vcmp.gt.f32.partialorder %v1353, 0.0
        %vm1382 = vcmp.gt.f32.partialorder %v1354, 0.0
        %vm1383 = vcmp.gt.f32.partialorder %v1355, 0.0
        %vm1384 = vcmp.gt.f32.partialorder %v1356, 0.0
        %vm1385 = vcmp.gt.f32.partialorder %v1357, 0.0
        %vm1386 = vcmp.gt.f32.partialorder %v1358, 0.0
        %vm1387 = vcmp.gt.f32.partialorder %v1359, 0.0
        %vm1388 = vcmp.gt.f32.partialorder %v1360, 0.0
        %vm1389 = vcmp.gt.f32.partialorder %v1361, 0.0
        %vm1390 = vcmp.gt.f32.partialorder %v1362, 0.0
        %vm1391 = vcmp.gt.f32.partialorder %v1363, 0.0
        %vm1392 = vcmp.gt.f32.partialorder %v1364, 0.0
        %vm1393 = vcmp.gt.f32.partialorder %v1365, 0.0
        %vm1394 = vcmp.gt.f32.partialorder %v1366, 0.0
        %vm1395 = vcmp.gt.f32.partialorder %v1367, 0.0
        %vm1396 = vcmp.gt.f32.partialorder %v1368, 0.0
        %vm1397 = vcmp.gt.f32.partialorder %v1369, 0.0
        %vm1398 = vcmp.gt.f32.partialorder %v1370, 0.0
        %vm1399 = vcmp.gt.f32.partialorder %v1371, 0.0
        %vm1400 = vcmp.gt.f32.partialorder %v1372, 0.0
        %v1401 = vmin.f32 %v1345, 0.0
        %v1402 = vmin.f32 %v1346, 0.0
        %v1403 = vmin.f32 %v1347, 0.0
        %v1404 = vmin.f32 %v1348, 0.0
        %v1405 = vmin.f32 %v1349, 0.0
        %v1406 = vmin.f32 %v1350, 0.0
        %v1407 = vmin.f32 %v1351, 0.0
        %v1408 = vmin.f32 %v1352, 0.0
        %v1409 = vmin.f32 %v1353, 0.0
        %v1410 = vmin.f32 %v1354, 0.0
        %v1411 = vmin.f32 %v1355, 0.0
        %v1412 = vmin.f32 %v1356, 0.0
        %v1413 = vmin.f32 %v1357, 0.0
        %v1414 = vmin.f32 %v1358, 0.0
        %v1415 = vmin.f32 %v1359, 0.0
        %v1416 = vmin.f32 %v1360, 0.0
        %v1417 = vmin.f32 %v1361, 0.0
        %v1418 = vmin.f32 %v1362, 0.0
        %v1419 = vmin.f32 %v1363, 0.0
        %v1420 = vmin.f32 %v1364, 0.0
        %v1421 = vmin.f32 %v1365, 0.0
        %v1422 = vmin.f32 %v1366, 0.0
        %v1423 = vmin.f32 %v1367, 0.0
        %v1424 = vmin.f32 %v1368, 0.0
        %v1425 = vmin.f32 %v1369, 0.0
        %v1426 = vmin.f32 %v1370, 0.0
        %v1427 = vmin.f32 %v1371, 0.0
        %v1428 = vmin.f32 %v1372, 0.0
        %v1429 = vpack.c.bf16 %v1402, %v1401
        %v1430 = vpack.c.bf16 %v1404, %v1403
        %v1431 = vpack.c.bf16 %v1406, %v1405
        %v1432 = vpack.c.bf16 %v1408, %v1407
        %v1433 = vpack.c.bf16 %v1410, %v1409
        %v1434 = vpack.c.bf16 %v1412, %v1411
        %v1435 = vpack.c.bf16 %v1414, %v1413
        %v1436 = vpack.c.bf16 %v1416, %v1415
        %v1437 = vpack.c.bf16 %v1418, %v1417
        %v1438 = vpack.c.bf16 %v1420, %v1419
        %v1439 = vpack.c.bf16 %v1422, %v1421
        %v1440 = vpack.c.bf16 %v1424, %v1423
        %v1441 = vpack.c.bf16 %v1426, %v1425
        %v1442 = vpack.c.bf16 %v1428, %v1427
        %v1443 = vunpack.c.l.bf16 %v1429
        %v1444 = vunpack.c.h.bf16 %v1429
        %v1445 = vunpack.c.l.bf16 %v1430
        %v1446 = vunpack.c.h.bf16 %v1430
        %v1447 = vunpack.c.l.bf16 %v1431
        %v1448 = vunpack.c.h.bf16 %v1431
        %v1449 = vunpack.c.l.bf16 %v1432
        %v1450 = vunpack.c.h.bf16 %v1432
        %v1451 = vunpack.c.l.bf16 %v1433
        %v1452 = vunpack.c.h.bf16 %v1433
        %v1453 = vunpack.c.l.bf16 %v1434
        %v1454 = vunpack.c.h.bf16 %v1434
        %v1455 = vunpack.c.l.bf16 %v1435
        %v1456 = vunpack.c.h.bf16 %v1435
        %v1457 = vunpack.c.l.bf16 %v1436
        %v1458 = vunpack.c.h.bf16 %v1436
        %v1459 = vunpack.c.l.bf16 %v1437
        %v1460 = vunpack.c.h.bf16 %v1437
        %v1461 = vunpack.c.l.bf16 %v1438
        %v1462 = vunpack.c.h.bf16 %v1438
        %v1463 = vunpack.c.l.bf16 %v1439
        %v1464 = vunpack.c.h.bf16 %v1439
        %v1465 = vunpack.c.l.bf16 %v1440
        %v1466 = vunpack.c.h.bf16 %v1440
        %v1467 = vunpack.c.l.bf16 %v1441
        %v1468 = vunpack.c.h.bf16 %v1441
        %v1469 = vunpack.c.l.bf16 %v1442
        %v1470 = vunpack.c.h.bf16 %v1442
        %v1471 = vmul.f32 %v1443, 1.442695
        %v1472 = vpow.pop %v1471
        %v1473 = vmul.f32 %v1444, 1.442695
        %v1474 = vpow.pop %v1473
        %v1475 = vmul.f32 %v1445, 1.442695
        %v1476 = vpow.pop %v1475
        %v1477 = vmul.f32 %v1446, 1.442695
        %v1478 = vpow.pop %v1477
        %v1479 = vmul.f32 %v1447, 1.442695
        %v1480 = vpow.pop %v1479
        %v1481 = vmul.f32 %v1448, 1.442695
        %v1482 = vpow.pop %v1481
        %v1483 = vmul.f32 %v1449, 1.442695
        %v1484 = vpow.pop %v1483
        %v1485 = vmul.f32 %v1450, 1.442695
        %v1486 = vpow.pop %v1485
        %v1487 = vmul.f32 %v1451, 1.442695
        %v1488 = vpow.pop %v1487
        %v1489 = vmul.f32 %v1452, 1.442695
        %v1490 = vpow.pop %v1489
        %v1491 = vmul.f32 %v1453, 1.442695
        %v1492 = vpow.pop %v1491
        %v1493 = vmul.f32 %v1454, 1.442695
        %v1494 = vpow.pop %v1493
        %v1495 = vmul.f32 %v1455, 1.442695
        %v1496 = vpow.pop %v1495
        %v1497 = vmul.f32 %v1456, 1.442695
        %v1498 = vpow.pop %v1497
        %v1499 = vmul.f32 %v1457, 1.442695
        %v1500 = vpow.pop %v1499
        %v1501 = vmul.f32 %v1458, 1.442695
        %v1502 = vpow.pop %v1501
        %v1503 = vmul.f32 %v1459, 1.442695
        %v1504 = vpow.pop %v1503
        %v1505 = vmul.f32 %v1460, 1.442695
        %v1506 = vpow.pop %v1505
        %v1507 = vmul.f32 %v1461, 1.442695
        %v1508 = vpow.pop %v1507
        %v1509 = vmul.f32 %v1462, 1.442695
        %v1510 = vpow.pop %v1509
        %v1511 = vmul.f32 %v1463, 1.442695
        %v1512 = vpow.pop %v1511
        %v1513 = vmul.f32 %v1464, 1.442695
        %v1514 = vpow.pop %v1513
        %v1515 = vmul.f32 %v1465, 1.442695
        %v1516 = vpow.pop %v1515
        %v1517 = vmul.f32 %v1466, 1.442695
        %v1518 = vpow.pop %v1517
        %v1519 = vmul.f32 %v1467, 1.442695
        %v1520 = vpow.pop %v1519
        %v1521 = vmul.f32 %v1468, 1.442695
        %v1522 = vpow.pop %v1521
        %v1523 = vmul.f32 %v1469, 1.442695
        %v1524 = vpow.pop %v1523
        %v1525 = vmul.f32 %v1470, 1.442695
        %v1526 = vpow.pop %v1525
        %v1527 = vpack.c.bf16 %v1474, %v1472
        %v1528 = vpack.c.bf16 %v1478, %v1476
        %v1529 = vpack.c.bf16 %v1482, %v1480
        %v1530 = vpack.c.bf16 %v1486, %v1484
        %v1531 = vpack.c.bf16 %v1490, %v1488
        %v1532 = vpack.c.bf16 %v1494, %v1492
        %v1533 = vpack.c.bf16 %v1498, %v1496
        %v1534 = vpack.c.bf16 %v1502, %v1500
        %v1535 = vpack.c.bf16 %v1506, %v1504
        %v1536 = vpack.c.bf16 %v1510, %v1508
        %v1537 = vpack.c.bf16 %v1514, %v1512
        %v1538 = vpack.c.bf16 %v1518, %v1516
        %v1539 = vpack.c.bf16 %v1522, %v1520
        %v1540 = vpack.c.bf16 %v1526, %v1524
        %v1541 = vunpack.c.l.bf16 %v1527
        %v1542 = vunpack.c.h.bf16 %v1527
        %v1543 = vunpack.c.l.bf16 %v1528
        %v1544 = vunpack.c.h.bf16 %v1528
        %v1545 = vunpack.c.l.bf16 %v1529
        %v1546 = vunpack.c.h.bf16 %v1529
        %v1547 = vunpack.c.l.bf16 %v1530
        %v1548 = vunpack.c.h.bf16 %v1530
        %v1549 = vunpack.c.l.bf16 %v1531
        %v1550 = vunpack.c.h.bf16 %v1531
        %v1551 = vunpack.c.l.bf16 %v1532
        %v1552 = vunpack.c.h.bf16 %v1532
        %v1553 = vunpack.c.l.bf16 %v1533
        %v1554 = vunpack.c.h.bf16 %v1533
        %v1555 = vunpack.c.l.bf16 %v1534
        %v1556 = vunpack.c.h.bf16 %v1534
        %v1557 = vunpack.c.l.bf16 %v1535
        %v1558 = vunpack.c.h.bf16 %v1535
        %v1559 = vunpack.c.l.bf16 %v1536
        %v1560 = vunpack.c.h.bf16 %v1536
        %v1561 = vunpack.c.l.bf16 %v1537
        %v1562 = vunpack.c.h.bf16 %v1537
        %v1563 = vunpack.c.l.bf16 %v1538
        %v1564 = vunpack.c.h.bf16 %v1538
        %v1565 = vunpack.c.l.bf16 %v1539
        %v1566 = vunpack.c.h.bf16 %v1539
        %v1567 = vunpack.c.l.bf16 %v1540
        %v1568 = vunpack.c.h.bf16 %v1540
        %v1569 = vsub.f32 %v1541, 1.0
        %v1570 = vsub.f32 %v1542, 1.0
        %v1571 = vsub.f32 %v1543, 1.0
        %v1572 = vsub.f32 %v1544, 1.0
        %v1573 = vsub.f32 %v1545, 1.0
        %v1574 = vsub.f32 %v1546, 1.0
        %v1575 = vsub.f32 %v1547, 1.0
        %v1576 = vsub.f32 %v1548, 1.0
        %v1577 = vsub.f32 %v1549, 1.0
        %v1578 = vsub.f32 %v1550, 1.0
        %v1579 = vsub.f32 %v1551, 1.0
        %v1580 = vsub.f32 %v1552, 1.0
        %v1581 = vsub.f32 %v1553, 1.0
        %v1582 = vsub.f32 %v1554, 1.0
        %v1583 = vsub.f32 %v1555, 1.0
        %v1584 = vsub.f32 %v1556, 1.0
        %v1585 = vsub.f32 %v1557, 1.0
        %v1586 = vsub.f32 %v1558, 1.0
        %v1587 = vsub.f32 %v1559, 1.0
        %v1588 = vsub.f32 %v1560, 1.0
        %v1589 = vsub.f32 %v1561, 1.0
        %v1590 = vsub.f32 %v1562, 1.0
        %v1591 = vsub.f32 %v1563, 1.0
        %v1592 = vsub.f32 %v1564, 1.0
        %v1593 = vsub.f32 %v1565, 1.0
        %v1594 = vsub.f32 %v1566, 1.0
        %v1595 = vsub.f32 %v1567, 1.0
        %v1596 = vsub.f32 %v1568, 1.0
        %v1597 = vpack.c.bf16 %v1570, %v1569
        %v1598 = vpack.c.bf16 %v1572, %v1571
        %v1599 = vpack.c.bf16 %v1574, %v1573
        %v1600 = vpack.c.bf16 %v1576, %v1575
        %v1601 = vpack.c.bf16 %v1578, %v1577
        %v1602 = vpack.c.bf16 %v1580, %v1579
        %v1603 = vpack.c.bf16 %v1582, %v1581
        %v1604 = vpack.c.bf16 %v1584, %v1583
        %v1605 = vpack.c.bf16 %v1586, %v1585
        %v1606 = vpack.c.bf16 %v1588, %v1587
        %v1607 = vpack.c.bf16 %v1590, %v1589
        %v1608 = vpack.c.bf16 %v1592, %v1591
        %v1609 = vpack.c.bf16 %v1594, %v1593
        %v1610 = vpack.c.bf16 %v1596, %v1595
        %vm1611 = vmpackc.low %vm1374, %vm1373
        %vm1612 = vmpackc.low %vm1376, %vm1375
        %vm1613 = vmpackc.low %vm1378, %vm1377
        %vm1614 = vmpackc.low %vm1380, %vm1379
        %vm1615 = vmpackc.low %vm1382, %vm1381
        %vm1616 = vmpackc.low %vm1384, %vm1383
        %vm1617 = vmpackc.low %vm1386, %vm1385
        %vm1618 = vmpackc.low %vm1388, %vm1387
        %vm1619 = vmpackc.low %vm1390, %vm1389
        %vm1620 = vmpackc.low %vm1392, %vm1391
        %vm1621 = vmpackc.low %vm1394, %vm1393
        %vm1622 = vmpackc.low %vm1396, %vm1395
        %vm1623 = vmpackc.low %vm1398, %vm1397
        %vm1624 = vmpackc.low %vm1400, %vm1399
        %v1625 = vsel %vm1611, %v1331, %v1597
        %v1626 = vsel %vm1612, %v1332, %v1598
        %v1627 = vsel %vm1613, %v1333, %v1599
        %v1628 = vsel %vm1614, %v1334, %v1600
        %v1629 = vsel %vm1615, %v1335, %v1601
        %v1630 = vsel %vm1616, %v1336, %v1602
        %v1631 = vsel %vm1617, %v1337, %v1603
        %v1632 = vsel %vm1618, %v1338, %v1604
        %v1633 = vsel %vm1619, %v1339, %v1605
        %v1634 = vsel %vm1620, %v1340, %v1606
        %v1635 = vsel %vm1621, %v1341, %v1607
        %v1636 = vsel %vm1622, %v1342, %v1608
        %v1637 = vsel %vm1623, %v1343, %v1609
        %v1638 = vsel %vm1624, %v1344, %v1610
        %v1639 = vld [vmem:[#allocation6] sm:$0xff]
        %v1640 = vld [vmem:[#allocation6 + $0x8] sm:$0xff]
        %v1641 = vld [vmem:[#allocation6 + $0x10] sm:$0xff]
        %v1642 = vld [vmem:[#allocation6 + $0x18] sm:$0xff]
        %v1643 = vld [vmem:[#allocation6 + $0x20] sm:$0xff]
        %v1644 = vld [vmem:[#allocation6 + $0x28] sm:$0xff]
        %v1645 = vld [vmem:[#allocation6 + $0x30] sm:$0xff]
        %v1646 = vld [vmem:[#allocation6 + $0x38] sm:$0xff]
        %v1647 = vld [vmem:[#allocation6 + $0x40] sm:$0xff]
        %v1648 = vld [vmem:[#allocation6 + $0x48] sm:$0xff]
        %v1649 = vld [vmem:[#allocation6 + $0x50] sm:$0xff]
        %v1650 = vld [vmem:[#allocation6 + $0x58] sm:$0xff]
        %v1651 = vld [vmem:[#allocation6 + $0x60] sm:$0xff]
        %v1652 = vld [vmem:[#allocation6 + $0x68] sm:$0xff]
        %v1653 = vld [vmem:[#allocation6 + $0x70] sm:$0xff]
        %v1654 = vld [vmem:[#allocation6 + $0x78] sm:$0xff]
        %v1655 = vld [vmem:[#allocation6 + $0x80] sm:$0xff]
        %v1656 = vld [vmem:[#allocation6 + $0x88] sm:$0xff]
        %v1657 = vld [vmem:[#allocation6 + $0x90] sm:$0xff]
        %v1658 = vld [vmem:[#allocation6 + $0x98] sm:$0xff]
        %v1659 = vld [vmem:[#allocation6 + $0xa0] sm:$0xff]
        %v1660 = vld [vmem:[#allocation6 + $0xa8] sm:$0xff]
        %v1661 = vld [vmem:[#allocation6 + $0xb0] sm:$0xff]
        %v1662 = vld [vmem:[#allocation6 + $0xb8] sm:$0xff]
        %v1663 = vld [vmem:[#allocation6 + $0xc0] sm:$0xff]
        %v1664 = vld [vmem:[#allocation6 + $0xc8] sm:$0xff]
        %v1665 = vld [vmem:[#allocation6 + $0xd0] sm:$0xff]
        %v1666 = vld [vmem:[#allocation6 + $0xd8] sm:$0xff]
        %v1667 = vld [vmem:[#allocation6 + $0xe0] sm:$0xff]
        %v1668 = vld [vmem:[#allocation6 + $0xe8] sm:$0xff]
        %v1669 = vld [vmem:[#allocation6 + $0xf0] sm:$0xff]
        %v1670 = vld [vmem:[#allocation6 + $0xf8] sm:$0xff]
        %v1671 = vld [vmem:[%s6] sm:$0x3]
        %v1673 = vperm.slane %v1671, 0
        %v1674 = vperm.slane %v1671, 1
        %v1691 = vunpack.c.l.b16 %v1625
        %v1692 = vunpack.c.h.b16 %v1625
        %v1693 = vunpack.c.l.b16 %v1626
        %v1694 = vunpack.c.h.b16 %v1626
        %v1695 = vunpack.c.l.b16 %v1627
        %v1696 = vunpack.c.h.b16 %v1627
        %v1697 = vunpack.c.l.b16 %v1628
        %v1698 = vunpack.c.h.b16 %v1628
        %v1699 = vunpack.c.l.b16 %v1629
        %v1700 = vunpack.c.h.b16 %v1629
        %v1701 = vunpack.c.l.b16 %v1630
        %v1702 = vunpack.c.h.b16 %v1630
        %v1703 = vunpack.c.l.b16 %v1631
        %v1704 = vunpack.c.h.b16 %v1631
        %v1705 = vunpack.c.l.b16 %v1632
        %v1706 = vunpack.c.h.b16 %v1632
        %v1707 = vunpack.c.l.b16 %v1633
        %v1708 = vunpack.c.h.b16 %v1633
        %v1709 = vunpack.c.l.b16 %v1634
        %v1710 = vunpack.c.h.b16 %v1634
        %v1711 = vunpack.c.l.b16 %v1635
        %v1712 = vunpack.c.h.b16 %v1635
        %v1713 = vunpack.c.l.b16 %v1636
        %v1714 = vunpack.c.h.b16 %v1636
        %v1715 = vunpack.c.l.b16 %v1637
        %v1716 = vunpack.c.h.b16 %v1637
        %v1717 = vunpack.c.l.b16 %v1638
        %v1718 = vunpack.c.h.b16 %v1638
        %v1719 = vpack.c.b16 %v1693, %v1691
        %v1720 = vpack.c.b16 %v1694, %v1692
        %v1721 = vpack.c.b16 %v1697, %v1695
        %v1722 = vpack.c.b16 %v1698, %v1696
        %v1723 = vpack.c.b16 %v1701, %v1699
        %v1724 = vpack.c.b16 %v1702, %v1700
        %v1725 = vpack.c.b16 %v1705, %v1703
        %v1726 = vpack.c.b16 %v1706, %v1704
        %v1727 = vpack.c.b16 %v1709, %v1707
        %v1728 = vpack.c.b16 %v1710, %v1708
        %v1729 = vpack.c.b16 %v1713, %v1711
        %v1730 = vpack.c.b16 %v1714, %v1712
        %v1731 = vpack.c.b16 %v1717, %v1715
        %v1732 = vpack.c.b16 %v1718, %v1716
        %v1779 = vunpack.c.l.b16 %v1639
        %v1780 = vunpack.c.h.b16 %v1639
        %v1781 = vunpack.c.l.b16 %v1640
        %v1782 = vunpack.c.h.b16 %v1640
        %v1783 = vunpack.c.l.b16 %v1641
        %v1784 = vunpack.c.h.b16 %v1641
        %v1785 = vunpack.c.l.b16 %v1642
        %v1786 = vunpack.c.h.b16 %v1642
        %v1787 = vunpack.c.l.b16 %v1643
        %v1788 = vunpack.c.h.b16 %v1643
        %v1789 = vunpack.c.l.b16 %v1644
        %v1790 = vunpack.c.h.b16 %v1644
        %v1791 = vunpack.c.l.b16 %v1645
        %v1792 = vunpack.c.h.b16 %v1645
        %v1793 = vunpack.c.l.b16 %v1646
        %v1794 = vunpack.c.h.b16 %v1646
        %v1795 = vunpack.c.l.b16 %v1647
        %v1796 = vunpack.c.h.b16 %v1647
        %v1797 = vunpack.c.l.b16 %v1648
        %v1798 = vunpack.c.h.b16 %v1648
        %v1799 = vunpack.c.l.b16 %v1649
        %v1800 = vunpack.c.h.b16 %v1649
        %v1801 = vunpack.c.l.b16 %v1650
        %v1802 = vunpack.c.h.b16 %v1650
        %v1803 = vunpack.c.l.b16 %v1651
        %v1804 = vunpack.c.h.b16 %v1651
        %v1805 = vunpack.c.l.b16 %v1652
        %v1806 = vunpack.c.h.b16 %v1652
        %v1807 = vunpack.c.l.b16 %v1653
        %v1808 = vunpack.c.h.b16 %v1653
        %v1809 = vunpack.c.l.b16 %v1654
        %v1810 = vunpack.c.h.b16 %v1654
        %v1811 = vunpack.c.l.b16 %v1655
        %v1812 = vunpack.c.h.b16 %v1655
        %v1813 = vunpack.c.l.b16 %v1656
        %v1814 = vunpack.c.h.b16 %v1656
        %v1815 = vunpack.c.l.b16 %v1657
        %v1816 = vunpack.c.h.b16 %v1657
        %v1817 = vunpack.c.l.b16 %v1658
        %v1818 = vunpack.c.h.b16 %v1658
        %v1819 = vunpack.c.l.b16 %v1659
        %v1820 = vunpack.c.h.b16 %v1659
        %v1821 = vunpack.c.l.b16 %v1660
        %v1822 = vunpack.c.h.b16 %v1660
        %v1823 = vunpack.c.l.b16 %v1661
        %v1824 = vunpack.c.h.b16 %v1661
        %v1825 = vunpack.c.l.b16 %v1662
        %v1826 = vunpack.c.h.b16 %v1662
        %v1827 = vunpack.c.l.b16 %v1663
        %v1828 = vunpack.c.h.b16 %v1663
        %v1829 = vunpack.c.l.b16 %v1664
        %v1830 = vunpack.c.h.b16 %v1664
        %v1831 = vunpack.c.l.b16 %v1665
        %v1832 = vunpack.c.h.b16 %v1665
        %v1833 = vunpack.c.l.b16 %v1666
        %v1834 = vunpack.c.h.b16 %v1666
        %v1835 = vunpack.c.l.b16 %v1667
        %v1836 = vunpack.c.h.b16 %v1667
        %v1837 = vunpack.c.l.b16 %v1668
        %v1838 = vunpack.c.h.b16 %v1668
        %v1839 = vunpack.c.l.b16 %v1669
        %v1840 = vunpack.c.h.b16 %v1669
        %v1841 = vunpack.c.l.b16 %v1670
        %v1842 = vunpack.c.h.b16 %v1670
        %v1843 = vpack.c.b16 %v1781, %v1779
        %v1844 = vpack.c.b16 %v1782, %v1780
        %v1845 = vpack.c.b16 %v1785, %v1783
        %v1846 = vpack.c.b16 %v1786, %v1784
        %v1847 = vpack.c.b16 %v1789, %v1787
        %v1848 = vpack.c.b16 %v1790, %v1788
        %v1849 = vpack.c.b16 %v1793, %v1791
        %v1850 = vpack.c.b16 %v1794, %v1792
        %v1851 = vpack.c.b16 %v1797, %v1795
        %v1852 = vpack.c.b16 %v1798, %v1796
        %v1853 = vpack.c.b16 %v1801, %v1799
        %v1854 = vpack.c.b16 %v1802, %v1800
        %v1855 = vpack.c.b16 %v1805, %v1803
        %v1856 = vpack.c.b16 %v1806, %v1804
        %v1857 = vpack.c.b16 %v1809, %v1807
        %v1858 = vpack.c.b16 %v1810, %v1808
        %v1859 = vpack.c.b16 %v1813, %v1811
        %v1860 = vpack.c.b16 %v1814, %v1812
        %v1861 = vpack.c.b16 %v1817, %v1815
        %v1862 = vpack.c.b16 %v1818, %v1816
        %v1863 = vpack.c.b16 %v1821, %v1819
        %v1864 = vpack.c.b16 %v1822, %v1820
        %v1865 = vpack.c.b16 %v1825, %v1823
        %v1866 = vpack.c.b16 %v1826, %v1824
        %v1867 = vpack.c.b16 %v1829, %v1827
        %v1868 = vpack.c.b16 %v1830, %v1828
        %v1869 = vpack.c.b16 %v1833, %v1831
        %v1870 = vpack.c.b16 %v1834, %v1832
        %v1871 = vpack.c.b16 %v1837, %v1835
        %v1872 = vpack.c.b16 %v1838, %v1836
        %v1873 = vpack.c.b16 %v1841, %v1839
        %v1874 = vpack.c.b16 %v1842, %v1840
        %1907 = vmatpush.bf16.msra.mxu0 %v1857
        %1908 = vmatpush.bf16.msra.mxu0 %v1855
        %1909 = vmatpush.bf16.msra.mxu0 %v1853
        %1910 = vmatpush.bf16.msra.mxu0 %v1851
        %1911 = vmatpush.bf16.msra.mxu0 %v1849
        %1912 = vmatpush.bf16.msra.mxu0 %v1847
        %1913 = vmatpush.bf16.msra.mxu0 %v1845
        %1914 = vmatpush.bf16.msra.mxu0 %v1843
        %1915 = vmatmul.bf16.gmra.mxu0 %v1719
        %v1916 = vpop.f32.mrf.mxu0
        %v1917 = vadd.f32 %v1673, %v1916
        %v1918 = vpop.f32.mrf.mxu0
        %v1919 = vadd.f32 %v1673, %v1918
        %1920 = vmatmul.bf16.gmra.mxu0 %v1721
        %v1921 = vpop.f32.mrf.mxu0
        %v1922 = vadd.f32 %v1673, %v1921
        %v1923 = vpop.f32.mrf.mxu0
        %v1924 = vadd.f32 %v1673, %v1923
        %1925 = vmatmul.bf16.gmra.mxu0 %v1723
        %v1926 = vpop.f32.mrf.mxu0
        %v1927 = vadd.f32 %v1673, %v1926
        %v1928 = vpop.f32.mrf.mxu0
        %v1929 = vadd.f32 %v1673, %v1928
        %1930 = vmatmul.bf16.gmra.mxu0 %v1725
        %v1931 = vpop.f32.mrf.mxu0
        %v1932 = vadd.f32 %v1673, %v1931
        %v1933 = vpop.f32.mrf.mxu0
        %v1934 = vadd.f32 %v1673, %v1933
        %1935 = vmatmul.bf16.gmra.mxu0 %v1727
        %v1936 = vpop.f32.mrf.mxu0
        %v1937 = vadd.f32 %v1673, %v1936
        %v1938 = vpop.f32.mrf.mxu0
        %v1939 = vadd.f32 %v1673, %v1938
        %1940 = vmatmul.bf16.gmra.mxu0 %v1729
        %v1941 = vpop.f32.mrf.mxu0
        %v1942 = vadd.f32 %v1673, %v1941
        %v1943 = vpop.f32.mrf.mxu0
        %v1944 = vadd.f32 %v1673, %v1943
        %1945 = vmatmul.bf16.gmra.mxu0 %v1731
        %v1946 = vpop.f32.mrf.mxu0
        %v1947 = vadd.f32 %v1673, %v1946
        %v1948 = vpop.f32.mrf.mxu0
        %v1949 = vadd.f32 %v1673, %v1948
        %1950 = vdwg.mxu0
        %1951 = vmatpush.bf16.msra.mxu0 %v1873
        %1952 = vmatpush.bf16.msra.mxu0 %v1871
        %1953 = vmatpush.bf16.msra.mxu0 %v1869
        %1954 = vmatpush.bf16.msra.mxu0 %v1867
        %1955 = vmatpush.bf16.msra.mxu0 %v1865
        %1956 = vmatpush.bf16.msra.mxu0 %v1863
        %1957 = vmatpush.bf16.msra.mxu0 %v1861
        %1958 = vmatpush.bf16.msra.mxu0 %v1859
        %1959 = vmatmul.bf16.gmra.mxu0 %v1720
        %v1960 = vpop.f32.mrf.mxu0
        %v1961 = vadd.f32 %v1917, %v1960
        %v1962 = vpop.f32.mrf.mxu0
        %v1963 = vadd.f32 %v1919, %v1962
        %1964 = vmatmul.bf16.gmra.mxu0 %v1722
        %v1965 = vpop.f32.mrf.mxu0
        %v1966 = vadd.f32 %v1922, %v1965
        %v1967 = vpop.f32.mrf.mxu0
        %v1968 = vadd.f32 %v1924, %v1967
        %1969 = vmatmul.bf16.gmra.mxu0 %v1724
        %v1970 = vpop.f32.mrf.mxu0
        %v1971 = vadd.f32 %v1927, %v1970
        %v1972 = vpop.f32.mrf.mxu0
        %v1973 = vadd.f32 %v1929, %v1972
        %1974 = vmatmul.bf16.gmra.mxu0 %v1726
        %v1975 = vpop.f32.mrf.mxu0
        %v1976 = vadd.f32 %v1932, %v1975
        %v1977 = vpop.f32.mrf.mxu0
        %v1978 = vadd.f32 %v1934, %v1977
        %1979 = vmatmul.bf16.gmra.mxu0 %v1728
        %v1980 = vpop.f32.mrf.mxu0
        %v1981 = vadd.f32 %v1937, %v1980
        %v1982 = vpop.f32.mrf.mxu0
        %v1983 = vadd.f32 %v1939, %v1982
        %1984 = vmatmul.bf16.gmra.mxu0 %v1730
        %v1985 = vpop.f32.mrf.mxu0
        %v1986 = vadd.f32 %v1942, %v1985
        %v1987 = vpop.f32.mrf.mxu0
        %v1988 = vadd.f32 %v1944, %v1987
        %1989 = vmatmul.bf16.gmra.mxu0 %v1732
        %v1990 = vpop.f32.mrf.mxu0
        %v1991 = vadd.f32 %v1947, %v1990
        %v1992 = vpop.f32.mrf.mxu0
        %v1993 = vadd.f32 %v1949, %v1992
        %1994 = vdwg.mxu0
        %1995 = vmatpush.bf16.msra.mxu0 %v1858
        %1996 = vmatpush.bf16.msra.mxu0 %v1856
        %1997 = vmatpush.bf16.msra.mxu0 %v1854
        %1998 = vmatpush.bf16.msra.mxu0 %v1852
        %1999 = vmatpush.bf16.msra.mxu0 %v1850
        %2000 = vmatpush.bf16.msra.mxu0 %v1848
        %2001 = vmatpush.bf16.msra.mxu0 %v1846
        %2002 = vmatpush.bf16.msra.mxu0 %v1844
        %2003 = vmatmul.bf16.gmra.mxu0 %v1719
        %v2004 = vpop.f32.mrf.mxu0
        %v2005 = vadd.f32 %v1674, %v2004
        %v2006 = vpop.f32.mrf.mxu0
        %v2007 = vadd.f32 %v1674, %v2006
        %2008 = vmatmul.bf16.gmra.mxu0 %v1721
        %v2009 = vpop.f32.mrf.mxu0
        %v2010 = vadd.f32 %v1674, %v2009
        %v2011 = vpop.f32.mrf.mxu0
        %v2012 = vadd.f32 %v1674, %v2011
        %2013 = vmatmul.bf16.gmra.mxu0 %v1723
        %v2014 = vpop.f32.mrf.mxu0
        %v2015 = vadd.f32 %v1674, %v2014
        %v2016 = vpop.f32.mrf.mxu0
        %v2017 = vadd.f32 %v1674, %v2016
        %2018 = vmatmul.bf16.gmra.mxu0 %v1725
        %v2019 = vpop.f32.mrf.mxu0
        %v2020 = vadd.f32 %v1674, %v2019
        %v2021 = vpop.f32.mrf.mxu0
        %v2022 = vadd.f32 %v1674, %v2021
        %2023 = vmatmul.bf16.gmra.mxu0 %v1727
        %v2024 = vpop.f32.mrf.mxu0
        %v2025 = vadd.f32 %v1674, %v2024
        %v2026 = vpop.f32.mrf.mxu0
        %v2027 = vadd.f32 %v1674, %v2026
        %2028 = vmatmul.bf16.gmra.mxu0 %v1729
        %v2029 = vpop.f32.mrf.mxu0
        %v2030 = vadd.f32 %v1674, %v2029
        %v2031 = vpop.f32.mrf.mxu0
        %v2032 = vadd.f32 %v1674, %v2031
        %2033 = vmatmul.bf16.gmra.mxu0 %v1731
        %v2034 = vpop.f32.mrf.mxu0
        %v2035 = vadd.f32 %v1674, %v2034
        %v2036 = vpop.f32.mrf.mxu0
        %v2037 = vadd.f32 %v1674, %v2036
        %2038 = vdwg.mxu0
        %2039 = vmatpush.bf16.msra.mxu0 %v1874
        %2040 = vmatpush.bf16.msra.mxu0 %v1872
        %2041 = vmatpush.bf16.msra.mxu0 %v1870
        %2042 = vmatpush.bf16.msra.mxu0 %v1868
        %2043 = vmatpush.bf16.msra.mxu0 %v1866
        %2044 = vmatpush.bf16.msra.mxu0 %v1864
        %2045 = vmatpush.bf16.msra.mxu0 %v1862
        %2046 = vmatpush.bf16.msra.mxu0 %v1860
        %2047 = vmatmul.bf16.gmra.mxu0 %v1720
        %v2048 = vpop.f32.mrf.mxu0
        %v2049 = vadd.f32 %v2005, %v2048
        %v2050 = vpop.f32.mrf.mxu0
        %v2051 = vadd.f32 %v2007, %v2050
        %2052 = vmatmul.bf16.gmra.mxu0 %v1722
        %v2053 = vpop.f32.mrf.mxu0
        %v2054 = vadd.f32 %v2010, %v2053
        %v2055 = vpop.f32.mrf.mxu0
        %v2056 = vadd.f32 %v2012, %v2055
        %2057 = vmatmul.bf16.gmra.mxu0 %v1724
        %v2058 = vpop.f32.mrf.mxu0
        %v2059 = vadd.f32 %v2015, %v2058
        %v2060 = vpop.f32.mrf.mxu0
        %v2061 = vadd.f32 %v2017, %v2060
        %2062 = vmatmul.bf16.gmra.mxu0 %v1726
        %v2063 = vpop.f32.mrf.mxu0
        %v2064 = vadd.f32 %v2020, %v2063
        %v2065 = vpop.f32.mrf.mxu0
        %v2066 = vadd.f32 %v2022, %v2065
        %2067 = vmatmul.bf16.gmra.mxu0 %v1728
        %v2068 = vpop.f32.mrf.mxu0
        %v2069 = vadd.f32 %v2025, %v2068
        %v2070 = vpop.f32.mrf.mxu0
        %v2071 = vadd.f32 %v2027, %v2070
        %2072 = vmatmul.bf16.gmra.mxu0 %v1730
        %v2073 = vpop.f32.mrf.mxu0
        %v2074 = vadd.f32 %v2030, %v2073
        %v2075 = vpop.f32.mrf.mxu0
        %v2076 = vadd.f32 %v2032, %v2075
        %2077 = vmatmul.bf16.gmra.mxu0 %v1732
        %v2078 = vpop.f32.mrf.mxu0
        %v2079 = vadd.f32 %v2035, %v2078
        %v2080 = vpop.f32.mrf.mxu0
        %v2081 = vadd.f32 %v2037, %v2080
        %2082 = vdwg.mxu0
        %v2083 = vpack.c.bf16 %v2049, %v1961
        %v2084 = vpack.c.bf16 %v2051, %v1963
        %v2085 = vpack.c.bf16 %v2054, %v1966
        %v2086 = vpack.c.bf16 %v2056, %v1968
        %v2087 = vpack.c.bf16 %v2059, %v1971
        %v2088 = vpack.c.bf16 %v2061, %v1973
        %v2089 = vpack.c.bf16 %v2064, %v1976
        %v2090 = vpack.c.bf16 %v2066, %v1978
        %v2091 = vpack.c.bf16 %v2069, %v1981
        %v2092 = vpack.c.bf16 %v2071, %v1983
        %v2093 = vpack.c.bf16 %v2074, %v1986
        %v2094 = vpack.c.bf16 %v2076, %v1988
        %v2095 = vpack.c.bf16 %v2079, %v1991
        %v2096 = vpack.c.bf16 %v2081, %v1993
        %v2097 = vunpack.c.l.bf16 %v2083
        %v2098 = vunpack.c.h.bf16 %v2083
        %v2099 = vunpack.c.l.bf16 %v2084
        %v2100 = vunpack.c.h.bf16 %v2084
        %v2101 = vunpack.c.l.bf16 %v2085
        %v2102 = vunpack.c.h.bf16 %v2085
        %v2103 = vunpack.c.l.bf16 %v2086
        %v2104 = vunpack.c.h.bf16 %v2086
        %v2105 = vunpack.c.l.bf16 %v2087
        %v2106 = vunpack.c.h.bf16 %v2087
        %v2107 = vunpack.c.l.bf16 %v2088
        %v2108 = vunpack.c.h.bf16 %v2088
        %v2109 = vunpack.c.l.bf16 %v2089
        %v2110 = vunpack.c.h.bf16 %v2089
        %v2111 = vunpack.c.l.bf16 %v2090
        %v2112 = vunpack.c.h.bf16 %v2090
        %v2113 = vunpack.c.l.bf16 %v2091
        %v2114 = vunpack.c.h.bf16 %v2091
        %v2115 = vunpack.c.l.bf16 %v2092
        %v2116 = vunpack.c.h.bf16 %v2092
        %v2117 = vunpack.c.l.bf16 %v2093
        %v2118 = vunpack.c.h.bf16 %v2093
        %v2119 = vunpack.c.l.bf16 %v2094
        %v2120 = vunpack.c.h.bf16 %v2094
        %v2121 = vunpack.c.l.bf16 %v2095
        %v2122 = vunpack.c.h.bf16 %v2095
        %v2123 = vunpack.c.l.bf16 %v2096
        %v2124 = vunpack.c.h.bf16 %v2096
        %vm2125 = vcmp.gt.f32.partialorder %v2097, 0.0
        %vm2126 = vcmp.gt.f32.partialorder %v2098, 0.0
        %vm2127 = vcmp.gt.f32.partialorder %v2099, 0.0
        %vm2128 = vcmp.gt.f32.partialorder %v2100, 0.0
        %vm2129 = vcmp.gt.f32.partialorder %v2101, 0.0
        %vm2130 = vcmp.gt.f32.partialorder %v2102, 0.0
        %vm2131 = vcmp.gt.f32.partialorder %v2103, 0.0
        %vm2132 = vcmp.gt.f32.partialorder %v2104, 0.0
        %vm2133 = vcmp.gt.f32.partialorder %v2105, 0.0
        %vm2134 = vcmp.gt.f32.partialorder %v2106, 0.0
        %vm2135 = vcmp.gt.f32.partialorder %v2107, 0.0
        %vm2136 = vcmp.gt.f32.partialorder %v2108, 0.0
        %vm2137 = vcmp.gt.f32.partialorder %v2109, 0.0
        %vm2138 = vcmp.gt.f32.partialorder %v2110, 0.0
        %vm2139 = vcmp.gt.f32.partialorder %v2111, 0.0
        %vm2140 = vcmp.gt.f32.partialorder %v2112, 0.0
        %vm2141 = vcmp.gt.f32.partialorder %v2113, 0.0
        %vm2142 = vcmp.gt.f32.partialorder %v2114, 0.0
        %vm2143 = vcmp.gt.f32.partialorder %v2115, 0.0
        %vm2144 = vcmp.gt.f32.partialorder %v2116, 0.0
        %vm2145 = vcmp.gt.f32.partialorder %v2117, 0.0
        %vm2146 = vcmp.gt.f32.partialorder %v2118, 0.0
        %vm2147 = vcmp.gt.f32.partialorder %v2119, 0.0
        %vm2148 = vcmp.gt.f32.partialorder %v2120, 0.0
        %vm2149 = vcmp.gt.f32.partialorder %v2121, 0.0
        %vm2150 = vcmp.gt.f32.partialorder %v2122, 0.0
        %vm2151 = vcmp.gt.f32.partialorder %v2123, 0.0
        %vm2152 = vcmp.gt.f32.partialorder %v2124, 0.0
        %v2153 = vmin.f32 %v2097, 0.0
        %v2154 = vmin.f32 %v2098, 0.0
        %v2155 = vmin.f32 %v2099, 0.0
        %v2156 = vmin.f32 %v2100, 0.0
        %v2157 = vmin.f32 %v2101, 0.0
        %v2158 = vmin.f32 %v2102, 0.0
        %v2159 = vmin.f32 %v2103, 0.0
        %v2160 = vmin.f32 %v2104, 0.0
        %v2161 = vmin.f32 %v2105, 0.0
        %v2162 = vmin.f32 %v2106, 0.0
        %v2163 = vmin.f32 %v2107, 0.0
        %v2164 = vmin.f32 %v2108, 0.0
        %v2165 = vmin.f32 %v2109, 0.0
        %v2166 = vmin.f32 %v2110, 0.0
        %v2167 = vmin.f32 %v2111, 0.0
        %v2168 = vmin.f32 %v2112, 0.0
        %v2169 = vmin.f32 %v2113, 0.0
        %v2170 = vmin.f32 %v2114, 0.0
        %v2171 = vmin.f32 %v2115, 0.0
        %v2172 = vmin.f32 %v2116, 0.0
        %v2173 = vmin.f32 %v2117, 0.0
        %v2174 = vmin.f32 %v2118, 0.0
        %v2175 = vmin.f32 %v2119, 0.0
        %v2176 = vmin.f32 %v2120, 0.0
        %v2177 = vmin.f32 %v2121, 0.0
        %v2178 = vmin.f32 %v2122, 0.0
        %v2179 = vmin.f32 %v2123, 0.0
        %v2180 = vmin.f32 %v2124, 0.0
        %v2181 = vpack.c.bf16 %v2154, %v2153
        %v2182 = vpack.c.bf16 %v2156, %v2155
        %v2183 = vpack.c.bf16 %v2158, %v2157
        %v2184 = vpack.c.bf16 %v2160, %v2159
        %v2185 = vpack.c.bf16 %v2162, %v2161
        %v2186 = vpack.c.bf16 %v2164, %v2163
        %v2187 = vpack.c.bf16 %v2166, %v2165
        %v2188 = vpack.c.bf16 %v2168, %v2167
        %v2189 = vpack.c.bf16 %v2170, %v2169
        %v2190 = vpack.c.bf16 %v2172, %v2171
        %v2191 = vpack.c.bf16 %v2174, %v2173
        %v2192 = vpack.c.bf16 %v2176, %v2175
        %v2193 = vpack.c.bf16 %v2178, %v2177
        %v2194 = vpack.c.bf16 %v2180, %v2179
        %v2195 = vunpack.c.l.bf16 %v2181
        %v2196 = vunpack.c.h.bf16 %v2181
        %v2197 = vunpack.c.l.bf16 %v2182
        %v2198 = vunpack.c.h.bf16 %v2182
        %v2199 = vunpack.c.l.bf16 %v2183
        %v2200 = vunpack.c.h.bf16 %v2183
        %v2201 = vunpack.c.l.bf16 %v2184
        %v2202 = vunpack.c.h.bf16 %v2184
        %v2203 = vunpack.c.l.bf16 %v2185
        %v2204 = vunpack.c.h.bf16 %v2185
        %v2205 = vunpack.c.l.bf16 %v2186
        %v2206 = vunpack.c.h.bf16 %v2186
        %v2207 = vunpack.c.l.bf16 %v2187
        %v2208 = vunpack.c.h.bf16 %v2187
        %v2209 = vunpack.c.l.bf16 %v2188
        %v2210 = vunpack.c.h.bf16 %v2188
        %v2211 = vunpack.c.l.bf16 %v2189
        %v2212 = vunpack.c.h.bf16 %v2189
        %v2213 = vunpack.c.l.bf16 %v2190
        %v2214 = vunpack.c.h.bf16 %v2190
        %v2215 = vunpack.c.l.bf16 %v2191
        %v2216 = vunpack.c.h.bf16 %v2191
        %v2217 = vunpack.c.l.bf16 %v2192
        %v2218 = vunpack.c.h.bf16 %v2192
        %v2219 = vunpack.c.l.bf16 %v2193
        %v2220 = vunpack.c.h.bf16 %v2193
        %v2221 = vunpack.c.l.bf16 %v2194
        %v2222 = vunpack.c.h.bf16 %v2194
        %v2223 = vmul.f32 %v2195, 1.442695
        %v2224 = vpow.pop %v2223
        %v2225 = vmul.f32 %v2196, 1.442695
        %v2226 = vpow.pop %v2225
        %v2227 = vmul.f32 %v2197, 1.442695
        %v2228 = vpow.pop %v2227
        %v2229 = vmul.f32 %v2198, 1.442695
        %v2230 = vpow.pop %v2229
        %v2231 = vmul.f32 %v2199, 1.442695
        %v2232 = vpow.pop %v2231
        %v2233 = vmul.f32 %v2200, 1.442695
        %v2234 = vpow.pop %v2233
        %v2235 = vmul.f32 %v2201, 1.442695
        %v2236 = vpow.pop %v2235
        %v2237 = vmul.f32 %v2202, 1.442695
        %v2238 = vpow.pop %v2237
        %v2239 = vmul.f32 %v2203, 1.442695
        %v2240 = vpow.pop %v2239
        %v2241 = vmul.f32 %v2204, 1.442695
        %v2242 = vpow.pop %v2241
        %v2243 = vmul.f32 %v2205, 1.442695
        %v2244 = vpow.pop %v2243
        %v2245 = vmul.f32 %v2206, 1.442695
        %v2246 = vpow.pop %v2245
        %v2247 = vmul.f32 %v2207, 1.442695
        %v2248 = vpow.pop %v2247
        %v2249 = vmul.f32 %v2208, 1.442695
        %v2250 = vpow.pop %v2249
        %v2251 = vmul.f32 %v2209, 1.442695
        %v2252 = vpow.pop %v2251
        %v2253 = vmul.f32 %v2210, 1.442695
        %v2254 = vpow.pop %v2253
        %v2255 = vmul.f32 %v2211, 1.442695
        %v2256 = vpow.pop %v2255
        %v2257 = vmul.f32 %v2212, 1.442695
        %v2258 = vpow.pop %v2257
        %v2259 = vmul.f32 %v2213, 1.442695
        %v2260 = vpow.pop %v2259
        %v2261 = vmul.f32 %v2214, 1.442695
        %v2262 = vpow.pop %v2261
        %v2263 = vmul.f32 %v2215, 1.442695
        %v2264 = vpow.pop %v2263
        %v2265 = vmul.f32 %v2216, 1.442695
        %v2266 = vpow.pop %v2265
        %v2267 = vmul.f32 %v2217, 1.442695
        %v2268 = vpow.pop %v2267
        %v2269 = vmul.f32 %v2218, 1.442695
        %v2270 = vpow.pop %v2269
        %v2271 = vmul.f32 %v2219, 1.442695
        %v2272 = vpow.pop %v2271
        %v2273 = vmul.f32 %v2220, 1.442695
        %v2274 = vpow.pop %v2273
        %v2275 = vmul.f32 %v2221, 1.442695
        %v2276 = vpow.pop %v2275
        %v2277 = vmul.f32 %v2222, 1.442695
        %v2278 = vpow.pop %v2277
        %v2279 = vpack.c.bf16 %v2226, %v2224
        %v2280 = vpack.c.bf16 %v2230, %v2228
        %v2281 = vpack.c.bf16 %v2234, %v2232
        %v2282 = vpack.c.bf16 %v2238, %v2236
        %v2283 = vpack.c.bf16 %v2242, %v2240
        %v2284 = vpack.c.bf16 %v2246, %v2244
        %v2285 = vpack.c.bf16 %v2250, %v2248
        %v2286 = vpack.c.bf16 %v2254, %v2252
        %v2287 = vpack.c.bf16 %v2258, %v2256
        %v2288 = vpack.c.bf16 %v2262, %v2260
        %v2289 = vpack.c.bf16 %v2266, %v2264
        %v2290 = vpack.c.bf16 %v2270, %v2268
        %v2291 = vpack.c.bf16 %v2274, %v2272
        %v2292 = vpack.c.bf16 %v2278, %v2276
        %v2293 = vunpack.c.l.bf16 %v2279
        %v2294 = vunpack.c.h.bf16 %v2279
        %v2295 = vunpack.c.l.bf16 %v2280
        %v2296 = vunpack.c.h.bf16 %v2280
        %v2297 = vunpack.c.l.bf16 %v2281
        %v2298 = vunpack.c.h.bf16 %v2281
        %v2299 = vunpack.c.l.bf16 %v2282
        %v2300 = vunpack.c.h.bf16 %v2282
        %v2301 = vunpack.c.l.bf16 %v2283
        %v2302 = vunpack.c.h.bf16 %v2283
        %v2303 = vunpack.c.l.bf16 %v2284
        %v2304 = vunpack.c.h.bf16 %v2284
        %v2305 = vunpack.c.l.bf16 %v2285
        %v2306 = vunpack.c.h.bf16 %v2285
        %v2307 = vunpack.c.l.bf16 %v2286
        %v2308 = vunpack.c.h.bf16 %v2286
        %v2309 = vunpack.c.l.bf16 %v2287
        %v2310 = vunpack.c.h.bf16 %v2287
        %v2311 = vunpack.c.l.bf16 %v2288
        %v2312 = vunpack.c.h.bf16 %v2288
        %v2313 = vunpack.c.l.bf16 %v2289
        %v2314 = vunpack.c.h.bf16 %v2289
        %v2315 = vunpack.c.l.bf16 %v2290
        %v2316 = vunpack.c.h.bf16 %v2290
        %v2317 = vunpack.c.l.bf16 %v2291
        %v2318 = vunpack.c.h.bf16 %v2291
        %v2319 = vunpack.c.l.bf16 %v2292
        %v2320 = vunpack.c.h.bf16 %v2292
        %v2321 = vsub.f32 %v2293, 1.0
        %v2322 = vsub.f32 %v2294, 1.0
        %v2323 = vsub.f32 %v2295, 1.0
        %v2324 = vsub.f32 %v2296, 1.0
        %v2325 = vsub.f32 %v2297, 1.0
        %v2326 = vsub.f32 %v2298, 1.0
        %v2327 = vsub.f32 %v2299, 1.0
        %v2328 = vsub.f32 %v2300, 1.0
        %v2329 = vsub.f32 %v2301, 1.0
        %v2330 = vsub.f32 %v2302, 1.0
        %v2331 = vsub.f32 %v2303, 1.0
        %v2332 = vsub.f32 %v2304, 1.0
        %v2333 = vsub.f32 %v2305, 1.0
        %v2334 = vsub.f32 %v2306, 1.0
        %v2335 = vsub.f32 %v2307, 1.0
        %v2336 = vsub.f32 %v2308, 1.0
        %v2337 = vsub.f32 %v2309, 1.0
        %v2338 = vsub.f32 %v2310, 1.0
        %v2339 = vsub.f32 %v2311, 1.0
        %v2340 = vsub.f32 %v2312, 1.0
        %v2341 = vsub.f32 %v2313, 1.0
        %v2342 = vsub.f32 %v2314, 1.0
        %v2343 = vsub.f32 %v2315, 1.0
        %v2344 = vsub.f32 %v2316, 1.0
        %v2345 = vsub.f32 %v2317, 1.0
        %v2346 = vsub.f32 %v2318, 1.0
        %v2347 = vsub.f32 %v2319, 1.0
        %v2348 = vsub.f32 %v2320, 1.0
        %v2349 = vpack.c.bf16 %v2322, %v2321
        %v2350 = vpack.c.bf16 %v2324, %v2323
        %v2351 = vpack.c.bf16 %v2326, %v2325
        %v2352 = vpack.c.bf16 %v2328, %v2327
        %v2353 = vpack.c.bf16 %v2330, %v2329
        %v2354 = vpack.c.bf16 %v2332, %v2331
        %v2355 = vpack.c.bf16 %v2334, %v2333
        %v2356 = vpack.c.bf16 %v2336, %v2335
        %v2357 = vpack.c.bf16 %v2338, %v2337
        %v2358 = vpack.c.bf16 %v2340, %v2339
        %v2359 = vpack.c.bf16 %v2342, %v2341
        %v2360 = vpack.c.bf16 %v2344, %v2343
        %v2361 = vpack.c.bf16 %v2346, %v2345
        %v2362 = vpack.c.bf16 %v2348, %v2347
        %vm2363 = vmpackc.low %vm2126, %vm2125
        %vm2364 = vmpackc.low %vm2128, %vm2127
        %vm2365 = vmpackc.low %vm2130, %vm2129
        %vm2366 = vmpackc.low %vm2132, %vm2131
        %vm2367 = vmpackc.low %vm2134, %vm2133
        %vm2368 = vmpackc.low %vm2136, %vm2135
        %vm2369 = vmpackc.low %vm2138, %vm2137
        %vm2370 = vmpackc.low %vm2140, %vm2139
        %vm2371 = vmpackc.low %vm2142, %vm2141
        %vm2372 = vmpackc.low %vm2144, %vm2143
        %vm2373 = vmpackc.low %vm2146, %vm2145
        %vm2374 = vmpackc.low %vm2148, %vm2147
        %vm2375 = vmpackc.low %vm2150, %vm2149
        %vm2376 = vmpackc.low %vm2152, %vm2151
        %v2377 = vsel %vm2363, %v2083, %v2349
        %v2378 = vsel %vm2364, %v2084, %v2350
        %v2379 = vsel %vm2365, %v2085, %v2351
        %v2380 = vsel %vm2366, %v2086, %v2352
        %v2381 = vsel %vm2367, %v2087, %v2353
        %v2382 = vsel %vm2368, %v2088, %v2354
        %v2383 = vsel %vm2369, %v2089, %v2355
        %v2384 = vsel %vm2370, %v2090, %v2356
        %v2385 = vsel %vm2371, %v2091, %v2357
        %v2386 = vsel %vm2372, %v2092, %v2358
        %v2387 = vsel %vm2373, %v2093, %v2359
        %v2388 = vsel %vm2374, %v2094, %v2360
        %v2389 = vsel %vm2375, %v2095, %v2361
        %v2390 = vsel %vm2376, %v2096, %v2362
        %v2391 = vld [vmem:[#allocation7] sm:$0xf]
        %v2392 = vld [vmem:[#allocation7 + $0x4] sm:$0xf]
        %v2393 = vld [vmem:[#allocation7 + $0x8] sm:$0xf]
        %v2394 = vld [vmem:[#allocation7 + $0xc] sm:$0xf]
        %v2395 = vld [vmem:[#allocation7 + $0x10] sm:$0xf]
        %v2396 = vld [vmem:[#allocation7 + $0x14] sm:$0xf]
        %v2397 = vld [vmem:[#allocation7 + $0x18] sm:$0xf]
        %v2398 = vld [vmem:[#allocation7 + $0x1c] sm:$0xf]
        %v2399 = vld [vmem:[#allocation7 + $0x20] sm:$0xf]
        %v2400 = vld [vmem:[#allocation7 + $0x24] sm:$0xf]
        %v2401 = vld [vmem:[#allocation7 + $0x28] sm:$0xf]
        %v2402 = vld [vmem:[#allocation7 + $0x2c] sm:$0xf]
        %v2403 = vld [vmem:[#allocation7 + $0x30] sm:$0xf]
        %v2404 = vld [vmem:[#allocation7 + $0x34] sm:$0xf]
        %v2405 = vld [vmem:[#allocation7 + $0x38] sm:$0xf]
        %v2406 = vld [vmem:[#allocation7 + $0x3c] sm:$0xf]
        %v2407 = vld [vmem:[#allocation7 + $0x40] sm:$0xf]
        %v2408 = vld [vmem:[#allocation7 + $0x44] sm:$0xf]
        %v2409 = vld [vmem:[#allocation7 + $0x48] sm:$0xf]
        %v2410 = vld [vmem:[#allocation7 + $0x4c] sm:$0xf]
        %v2411 = vld [vmem:[#allocation7 + $0x50] sm:$0xf]
        %v2412 = vld [vmem:[#allocation7 + $0x54] sm:$0xf]
        %v2413 = vld [vmem:[#allocation7 + $0x58] sm:$0xf]
        %v2414 = vld [vmem:[#allocation7 + $0x5c] sm:$0xf]
        %v2415 = vld [vmem:[#allocation7 + $0x60] sm:$0xf]
        %v2416 = vld [vmem:[#allocation7 + $0x64] sm:$0xf]
        %v2417 = vld [vmem:[#allocation7 + $0x68] sm:$0xf]
        %v2418 = vld [vmem:[#allocation7 + $0x6c] sm:$0xf]
        %v2419 = vld [vmem:[#allocation7 + $0x70] sm:$0xf]
        %v2420 = vld [vmem:[#allocation7 + $0x74] sm:$0xf]
        %v2421 = vld [vmem:[#allocation7 + $0x78] sm:$0xf]
        %v2422 = vld [vmem:[#allocation7 + $0x7c] sm:$0xf]
        %v2423 = vld [vmem:[%s8] sm:$0x1]
        %v2425 = vperm.slane %v2423, 0
        %v2441 = vunpack.c.l.b16 %v2377
        %v2442 = vunpack.c.h.b16 %v2377
        %v2443 = vunpack.c.l.b16 %v2378
        %v2444 = vunpack.c.h.b16 %v2378
        %v2445 = vunpack.c.l.b16 %v2379
        %v2446 = vunpack.c.h.b16 %v2379
        %v2447 = vunpack.c.l.b16 %v2380
        %v2448 = vunpack.c.h.b16 %v2380
        %v2449 = vunpack.c.l.b16 %v2381
        %v2450 = vunpack.c.h.b16 %v2381
        %v2451 = vunpack.c.l.b16 %v2382
        %v2452 = vunpack.c.h.b16 %v2382
        %v2453 = vunpack.c.l.b16 %v2383
        %v2454 = vunpack.c.h.b16 %v2383
        %v2455 = vunpack.c.l.b16 %v2384
        %v2456 = vunpack.c.h.b16 %v2384
        %v2457 = vunpack.c.l.b16 %v2385
        %v2458 = vunpack.c.h.b16 %v2385
        %v2459 = vunpack.c.l.b16 %v2386
        %v2460 = vunpack.c.h.b16 %v2386
        %v2461 = vunpack.c.l.b16 %v2387
        %v2462 = vunpack.c.h.b16 %v2387
        %v2463 = vunpack.c.l.b16 %v2388
        %v2464 = vunpack.c.h.b16 %v2388
        %v2465 = vunpack.c.l.b16 %v2389
        %v2466 = vunpack.c.h.b16 %v2389
        %v2467 = vunpack.c.l.b16 %v2390
        %v2468 = vunpack.c.h.b16 %v2390
        %v2469 = vpack.c.b16 %v2443, %v2441
        %v2470 = vpack.c.b16 %v2444, %v2442
        %v2471 = vpack.c.b16 %v2447, %v2445
        %v2472 = vpack.c.b16 %v2448, %v2446
        %v2473 = vpack.c.b16 %v2451, %v2449
        %v2474 = vpack.c.b16 %v2452, %v2450
        %v2475 = vpack.c.b16 %v2455, %v2453
        %v2476 = vpack.c.b16 %v2456, %v2454
        %v2477 = vpack.c.b16 %v2459, %v2457
        %v2478 = vpack.c.b16 %v2460, %v2458
        %v2479 = vpack.c.b16 %v2463, %v2461
        %v2480 = vpack.c.b16 %v2464, %v2462
        %v2481 = vpack.c.b16 %v2467, %v2465
        %v2482 = vpack.c.b16 %v2468, %v2466
        %v2529 = vunpack.c.l.b16 %v2391
        %v2530 = vunpack.c.l.b16 %v2392
        %v2531 = vunpack.c.l.b16 %v2393
        %v2532 = vunpack.c.l.b16 %v2394
        %v2533 = vunpack.c.l.b16 %v2395
        %v2534 = vunpack.c.l.b16 %v2396
        %v2535 = vunpack.c.l.b16 %v2397
        %v2536 = vunpack.c.l.b16 %v2398
        %v2537 = vunpack.c.l.b16 %v2399
        %v2538 = vunpack.c.l.b16 %v2400
        %v2539 = vunpack.c.l.b16 %v2401
        %v2540 = vunpack.c.l.b16 %v2402
        %v2541 = vunpack.c.l.b16 %v2403
        %v2542 = vunpack.c.l.b16 %v2404
        %v2543 = vunpack.c.l.b16 %v2405
        %v2544 = vunpack.c.l.b16 %v2406
        %v2545 = vunpack.c.l.b16 %v2407
        %v2546 = vunpack.c.l.b16 %v2408
        %v2547 = vunpack.c.l.b16 %v2409
        %v2548 = vunpack.c.l.b16 %v2410
        %v2549 = vunpack.c.l.b16 %v2411
        %v2550 = vunpack.c.l.b16 %v2412
        %v2551 = vunpack.c.l.b16 %v2413
        %v2552 = vunpack.c.l.b16 %v2414
        %v2553 = vunpack.c.l.b16 %v2415
        %v2554 = vunpack.c.l.b16 %v2416
        %v2555 = vunpack.c.l.b16 %v2417
        %v2556 = vunpack.c.l.b16 %v2418
        %v2557 = vunpack.c.l.b16 %v2419
        %v2558 = vunpack.c.l.b16 %v2420
        %v2559 = vunpack.c.l.b16 %v2421
        %v2560 = vunpack.c.l.b16 %v2422
        %v2561 = vpack.c.b16 %v2530, %v2529
        %v2562 = vpack.c.b16 %v2532, %v2531
        %v2563 = vpack.c.b16 %v2534, %v2533
        %v2564 = vpack.c.b16 %v2536, %v2535
        %v2565 = vpack.c.b16 %v2538, %v2537
        %v2566 = vpack.c.b16 %v2540, %v2539
        %v2567 = vpack.c.b16 %v2542, %v2541
        %v2568 = vpack.c.b16 %v2544, %v2543
        %v2569 = vpack.c.b16 %v2546, %v2545
        %v2570 = vpack.c.b16 %v2548, %v2547
        %v2571 = vpack.c.b16 %v2550, %v2549
        %v2572 = vpack.c.b16 %v2552, %v2551
        %v2573 = vpack.c.b16 %v2554, %v2553
        %v2574 = vpack.c.b16 %v2556, %v2555
        %v2575 = vpack.c.b16 %v2558, %v2557
        %v2576 = vpack.c.b16 %v2560, %v2559
        %2593 = vmatpush.bf16.msra.mxu0 %v2568
        %2594 = vmatpush.bf16.msra.mxu0 %v2567
        %2595 = vmatpush.bf16.msra.mxu0 %v2566
        %2596 = vmatpush.bf16.msra.mxu0 %v2565
        %2597 = vmatpush.bf16.msra.mxu0 %v2564
        %2598 = vmatpush.bf16.msra.mxu0 %v2563
        %2599 = vmatpush.bf16.msra.mxu0 %v2562
        %2600 = vmatpush.bf16.msra.mxu0 %v2561
        %2601 = vmatmul.bf16.gmra.mxu0 %v2469
        %v2602 = vpop.f32.mrf.mxu0
        %v2603 = vadd.f32 %v2425, %v2602
        %v2604 = vpop.f32.mrf.mxu0
        %v2605 = vadd.f32 %v2425, %v2604
        %2606 = vmatmul.bf16.gmra.mxu0 %v2471
        %v2607 = vpop.f32.mrf.mxu0
        %v2608 = vadd.f32 %v2425, %v2607
        %v2609 = vpop.f32.mrf.mxu0
        %v2610 = vadd.f32 %v2425, %v2609
        %2611 = vmatmul.bf16.gmra.mxu0 %v2473
        %v2612 = vpop.f32.mrf.mxu0
        %v2613 = vadd.f32 %v2425, %v2612
        %v2614 = vpop.f32.mrf.mxu0
        %v2615 = vadd.f32 %v2425, %v2614
        %2616 = vmatmul.bf16.gmra.mxu0 %v2475
        %v2617 = vpop.f32.mrf.mxu0
        %v2618 = vadd.f32 %v2425, %v2617
        %v2619 = vpop.f32.mrf.mxu0
        %v2620 = vadd.f32 %v2425, %v2619
        %2621 = vmatmul.bf16.gmra.mxu0 %v2477
        %v2622 = vpop.f32.mrf.mxu0
        %v2623 = vadd.f32 %v2425, %v2622
        %v2624 = vpop.f32.mrf.mxu0
        %v2625 = vadd.f32 %v2425, %v2624
        %2626 = vmatmul.bf16.gmra.mxu0 %v2479
        %v2627 = vpop.f32.mrf.mxu0
        %v2628 = vadd.f32 %v2425, %v2627
        %v2629 = vpop.f32.mrf.mxu0
        %v2630 = vadd.f32 %v2425, %v2629
        %2631 = vmatmul.bf16.gmra.mxu0 %v2481
        %v2632 = vpop.f32.mrf.mxu0
        %v2633 = vadd.f32 %v2425, %v2632
        %v2634 = vpop.f32.mrf.mxu0
        %v2635 = vadd.f32 %v2425, %v2634
        %2636 = vdwg.mxu0
        %2637 = vmatpush.bf16.msra.mxu0 %v2576
        %2638 = vmatpush.bf16.msra.mxu0 %v2575
        %2639 = vmatpush.bf16.msra.mxu0 %v2574
        %2640 = vmatpush.bf16.msra.mxu0 %v2573
        %2641 = vmatpush.bf16.msra.mxu0 %v2572
        %2642 = vmatpush.bf16.msra.mxu0 %v2571
        %2643 = vmatpush.bf16.msra.mxu0 %v2570
        %2644 = vmatpush.bf16.msra.mxu0 %v2569
        %2645 = vmatmul.bf16.gmra.mxu0 %v2470
        %v2646 = vpop.f32.mrf.mxu0
        %v2647 = vadd.f32 %v2603, %v2646
        %v2648 = vpop.f32.mrf.mxu0
        %v2649 = vadd.f32 %v2605, %v2648
        %2650 = vmatmul.bf16.gmra.mxu0 %v2472
        %v2651 = vpop.f32.mrf.mxu0
        %v2652 = vadd.f32 %v2608, %v2651
        %v2653 = vpop.f32.mrf.mxu0
        %v2654 = vadd.f32 %v2610, %v2653
        %2655 = vmatmul.bf16.gmra.mxu0 %v2474
        %v2656 = vpop.f32.mrf.mxu0
        %v2657 = vadd.f32 %v2613, %v2656
        %v2658 = vpop.f32.mrf.mxu0
        %v2659 = vadd.f32 %v2615, %v2658
        %2660 = vmatmul.bf16.gmra.mxu0 %v2476
        %v2661 = vpop.f32.mrf.mxu0
        %v2662 = vadd.f32 %v2618, %v2661
        %v2663 = vpop.f32.mrf.mxu0
        %v2664 = vadd.f32 %v2620, %v2663
        %2665 = vmatmul.bf16.gmra.mxu0 %v2478
        %v2666 = vpop.f32.mrf.mxu0
        %v2667 = vadd.f32 %v2623, %v2666
        %v2668 = vpop.f32.mrf.mxu0
        %v2669 = vadd.f32 %v2625, %v2668
        %2670 = vmatmul.bf16.gmra.mxu0 %v2480
        %v2671 = vpop.f32.mrf.mxu0
        %v2672 = vadd.f32 %v2628, %v2671
        %v2673 = vpop.f32.mrf.mxu0
        %v2674 = vadd.f32 %v2630, %v2673
        %2675 = vmatmul.bf16.gmra.mxu0 %v2482
        %v2676 = vpop.f32.mrf.mxu0
        %v2677 = vadd.f32 %v2633, %v2676
        %v2678 = vpop.f32.mrf.mxu0
        %v2679 = vadd.f32 %v2635, %v2678
        %2680 = vdwg.mxu0
        %vm2681 = vcmp.gt.f32.partialorder %v2647, 20.0
        %vm2682 = vcmp.gt.f32.partialorder %v2649, 20.0
        %vm2683 = vcmp.gt.f32.partialorder %v2652, 20.0
        %vm2684 = vcmp.gt.f32.partialorder %v2654, 20.0
        %vm2685 = vcmp.gt.f32.partialorder %v2657, 20.0
        %vm2686 = vcmp.gt.f32.partialorder %v2659, 20.0
        %vm2687 = vcmp.gt.f32.partialorder %v2662, 20.0
        %vm2688 = vcmp.gt.f32.partialorder %v2664, 20.0
        %vm2689 = vcmp.gt.f32.partialorder %v2667, 20.0
        %vm2690 = vcmp.gt.f32.partialorder %v2669, 20.0
        %vm2691 = vcmp.gt.f32.partialorder %v2672, 20.0
        %vm2692 = vcmp.gt.f32.partialorder %v2674, 20.0
        %vm2693 = vcmp.gt.f32.partialorder %v2677, 20.0
        %vm2694 = vcmp.gt.f32.partialorder %v2679, 20.0
        %v2695 = vmul.f32 %v2647, 1.442695
        %v2696 = vpow.pop %v2695
        %v2697 = vmul.f32 %v2649, 1.442695
        %v2698 = vpow.pop %v2697
        %v2699 = vmul.f32 %v2652, 1.442695
        %v2700 = vpow.pop %v2699
        %v2701 = vmul.f32 %v2654, 1.442695
        %v2702 = vpow.pop %v2701
        %v2703 = vmul.f32 %v2657, 1.442695
        %v2704 = vpow.pop %v2703
        %v2705 = vmul.f32 %v2659, 1.442695
        %v2706 = vpow.pop %v2705
        %v2707 = vmul.f32 %v2662, 1.442695
        %v2708 = vpow.pop %v2707
        %v2709 = vmul.f32 %v2664, 1.442695
        %v2710 = vpow.pop %v2709
        %v2711 = vmul.f32 %v2667, 1.442695
        %v2712 = vpow.pop %v2711
        %v2713 = vmul.f32 %v2669, 1.442695
        %v2714 = vpow.pop %v2713
        %v2715 = vmul.f32 %v2672, 1.442695
        %v2716 = vpow.pop %v2715
        %v2717 = vmul.f32 %v2674, 1.442695
        %v2718 = vpow.pop %v2717
        %v2719 = vmul.f32 %v2677, 1.442695
        %v2720 = vpow.pop %v2719
        %v2721 = vmul.f32 %v2679, 1.442695
        %v2722 = vpow.pop %v2721
        %v2723 = vadd.f32 %v2696, 1.0
        %v2724 = vlog2.pop %v2723
        %v2725 = vmul.f32 %v2724, 0.6931472
        %v2726 = vmul.f32 -0.5, %v2696
        %v2727 = vadd.f32 %v2726, 1.0
        %v2728 = vmul.f32 %v2727, %v2696
        %v2729 = vand.u32 2147483647, %v2696
        %vm2730 = vcmp.lt.f32.partialorder %v2729, 0.0004427343
        %v2731 = vsel %vm2730, %v2728, %v2725
        %v2732 = vadd.f32 %v2698, 1.0
        %v2733 = vlog2.pop %v2732
        %v2734 = vmul.f32 %v2733, 0.6931472
        %v2735 = vmul.f32 -0.5, %v2698
        %v2736 = vadd.f32 %v2735, 1.0
        %v2737 = vmul.f32 %v2736, %v2698
        %v2738 = vand.u32 2147483647, %v2698
        %vm2739 = vcmp.lt.f32.partialorder %v2738, 0.0004427343
        %v2740 = vsel %vm2739, %v2737, %v2734
        %v2741 = vadd.f32 %v2700, 1.0
        %v2742 = vlog2.pop %v2741
        %v2743 = vmul.f32 %v2742, 0.6931472
        %v2744 = vmul.f32 -0.5, %v2700
        %v2745 = vadd.f32 %v2744, 1.0
        %v2746 = vmul.f32 %v2745, %v2700
        %v2747 = vand.u32 2147483647, %v2700
        %vm2748 = vcmp.lt.f32.partialorder %v2747, 0.0004427343
        %v2749 = vsel %vm2748, %v2746, %v2743
        %v2750 = vadd.f32 %v2702, 1.0
        %v2751 = vlog2.pop %v2750
        %v2752 = vmul.f32 %v2751, 0.6931472
        %v2753 = vmul.f32 -0.5, %v2702
        %v2754 = vadd.f32 %v2753, 1.0
        %v2755 = vmul.f32 %v2754, %v2702
        %v2756 = vand.u32 2147483647, %v2702
        %vm2757 = vcmp.lt.f32.partialorder %v2756, 0.0004427343
        %v2758 = vsel %vm2757, %v2755, %v2752
        %v2759 = vadd.f32 %v2704, 1.0
        %v2760 = vlog2.pop %v2759
        %v2761 = vmul.f32 %v2760, 0.6931472
        %v2762 = vmul.f32 -0.5, %v2704
        %v2763 = vadd.f32 %v2762, 1.0
        %v2764 = vmul.f32 %v2763, %v2704
        %v2765 = vand.u32 2147483647, %v2704
        %vm2766 = vcmp.lt.f32.partialorder %v2765, 0.0004427343
        %v2767 = vsel %vm2766, %v2764, %v2761
        %v2768 = vadd.f32 %v2706, 1.0
        %v2769 = vlog2.pop %v2768
        %v2770 = vmul.f32 %v2769, 0.6931472
        %v2771 = vmul.f32 -0.5, %v2706
        %v2772 = vadd.f32 %v2771, 1.0
        %v2773 = vmul.f32 %v2772, %v2706
        %v2774 = vand.u32 2147483647, %v2706
        %vm2775 = vcmp.lt.f32.partialorder %v2774, 0.0004427343
        %v2776 = vsel %vm2775, %v2773, %v2770
        %v2777 = vadd.f32 %v2708, 1.0
        %v2778 = vlog2.pop %v2777
        %v2779 = vmul.f32 %v2778, 0.6931472
        %v2780 = vmul.f32 -0.5, %v2708
        %v2781 = vadd.f32 %v2780, 1.0
        %v2782 = vmul.f32 %v2781, %v2708
        %v2783 = vand.u32 2147483647, %v2708
        %vm2784 = vcmp.lt.f32.partialorder %v2783, 0.0004427343
        %v2785 = vsel %vm2784, %v2782, %v2779
        %v2786 = vadd.f32 %v2710, 1.0
        %v2787 = vlog2.pop %v2786
        %v2788 = vmul.f32 %v2787, 0.6931472
        %v2789 = vmul.f32 -0.5, %v2710
        %v2790 = vadd.f32 %v2789, 1.0
        %v2791 = vmul.f32 %v2790, %v2710
        %v2792 = vand.u32 2147483647, %v2710
        %vm2793 = vcmp.lt.f32.partialorder %v2792, 0.0004427343
        %v2794 = vsel %vm2793, %v2791, %v2788
        %v2795 = vadd.f32 %v2712, 1.0
        %v2796 = vlog2.pop %v2795
        %v2797 = vmul.f32 %v2796, 0.6931472
        %v2798 = vmul.f32 -0.5, %v2712
        %v2799 = vadd.f32 %v2798, 1.0
        %v2800 = vmul.f32 %v2799, %v2712
        %v2801 = vand.u32 2147483647, %v2712
        %vm2802 = vcmp.lt.f32.partialorder %v2801, 0.0004427343
        %v2803 = vsel %vm2802, %v2800, %v2797
        %v2804 = vadd.f32 %v2714, 1.0
        %v2805 = vlog2.pop %v2804
        %v2806 = vmul.f32 %v2805, 0.6931472
        %v2807 = vmul.f32 -0.5, %v2714
        %v2808 = vadd.f32 %v2807, 1.0
        %v2809 = vmul.f32 %v2808, %v2714
        %v2810 = vand.u32 2147483647, %v2714
        %vm2811 = vcmp.lt.f32.partialorder %v2810, 0.0004427343
        %v2812 = vsel %vm2811, %v2809, %v2806
        %v2813 = vadd.f32 %v2716, 1.0
        %v2814 = vlog2.pop %v2813
        %v2815 = vmul.f32 %v2814, 0.6931472
        %v2816 = vmul.f32 -0.5, %v2716
        %v2817 = vadd.f32 %v2816, 1.0
        %v2818 = vmul.f32 %v2817, %v2716
        %v2819 = vand.u32 2147483647, %v2716
        %vm2820 = vcmp.lt.f32.partialorder %v2819, 0.0004427343
        %v2821 = vsel %vm2820, %v2818, %v2815
        %v2822 = vadd.f32 %v2718, 1.0
        %v2823 = vlog2.pop %v2822
        %v2824 = vmul.f32 %v2823, 0.6931472
        %v2825 = vmul.f32 -0.5, %v2718
        %v2826 = vadd.f32 %v2825, 1.0
        %v2827 = vmul.f32 %v2826, %v2718
        %v2828 = vand.u32 2147483647, %v2718
        %vm2829 = vcmp.lt.f32.partialorder %v2828, 0.0004427343
        %v2830 = vsel %vm2829, %v2827, %v2824
        %v2831 = vadd.f32 %v2720, 1.0
        %v2832 = vlog2.pop %v2831
        %v2833 = vmul.f32 %v2832, 0.6931472
        %v2834 = vmul.f32 -0.5, %v2720
        %v2835 = vadd.f32 %v2834, 1.0
        %v2836 = vmul.f32 %v2835, %v2720
        %v2837 = vand.u32 2147483647, %v2720
        %vm2838 = vcmp.lt.f32.partialorder %v2837, 0.0004427343
        %v2839 = vsel %vm2838, %v2836, %v2833
        %v2840 = vadd.f32 %v2722, 1.0
        %v2841 = vlog2.pop %v2840
        %v2842 = vmul.f32 %v2841, 0.6931472
        %v2843 = vmul.f32 -0.5, %v2722
        %v2844 = vadd.f32 %v2843, 1.0
        %v2845 = vmul.f32 %v2844, %v2722
        %v2846 = vand.u32 2147483647, %v2722
        %vm2847 = vcmp.lt.f32.partialorder %v2846, 0.0004427343
        %v2848 = vsel %vm2847, %v2845, %v2842
        %v2849 = vsel %vm2681, %v2647, %v2731
        %v2850 = vsel %vm2682, %v2649, %v2740
        %v2851 = vsel %vm2683, %v2652, %v2749
        %v2852 = vsel %vm2684, %v2654, %v2758
        %v2853 = vsel %vm2685, %v2657, %v2767
        %v2854 = vsel %vm2686, %v2659, %v2776
        %v2855 = vsel %vm2687, %v2662, %v2785
        %v2856 = vsel %vm2688, %v2664, %v2794
        %v2857 = vsel %vm2689, %v2667, %v2803
        %v2858 = vsel %vm2690, %v2669, %v2812
        %v2859 = vsel %vm2691, %v2672, %v2821
        %v2860 = vsel %vm2692, %v2674, %v2830
        %v2861 = vsel %vm2693, %v2677, %v2839
        %v2862 = vsel %vm2694, %v2679, %v2848
        %vm2863 = vcmask 31744
        %2864 = vst.msk [vmem:[%s399] sm:$0xff] %vm2863, %v2849
        %2865 = vst.msk [vmem:[%s399 + $0x8] sm:$0xff] %vm2863, %v2850
        %2866 = vst.msk [vmem:[%s399 + $0x10] sm:$0xff] %vm2863, %v2851
        %2867 = vst.msk [vmem:[%s399 + $0x18] sm:$0xff] %vm2863, %v2852
        %2868 = vst.msk [vmem:[%s399 + $0x20] sm:$0xff] %vm2863, %v2853
        %2869 = vst.msk [vmem:[%s399 + $0x28] sm:$0xff] %vm2863, %v2854
        %2870 = vst.msk [vmem:[%s399 + $0x30] sm:$0xff] %vm2863, %v2855
        %2871 = vst.msk [vmem:[%s399 + $0x38] sm:$0xff] %vm2863, %v2856
        %2872 = vst.msk [vmem:[%s399 + $0x40] sm:$0xff] %vm2863, %v2857
        %2873 = vst.msk [vmem:[%s399 + $0x48] sm:$0xff] %vm2863, %v2858
        %2874 = vst.msk [vmem:[%s399 + $0x50] sm:$0xff] %vm2863, %v2859
        %2875 = vst.msk [vmem:[%s399 + $0x58] sm:$0xff] %vm2863, %v2860
        %2876 = vst.msk [vmem:[%s399 + $0x60] sm:$0xff] %vm2863, %v2861
        %2877 = vst.msk [vmem:[%s399 + $0x68] sm:$0xff] %vm2863, %v2862
        %s2878 = smul.u32 14, %s23
        %p2879 = scmp.lt.s32.totalorder %s2878, 55
        %s2880 = scalar_select %p2879, %s2878, 55
        %s2881 = smul.addr %s2880, 8
        %s2882 = scalar_lea.vmem %s9, %s2881
        // Predicated region
        $region73: #{tpu_custom_call.1} parent=55 // pred_check
          %p2883 = pneg %p235
        $region74: #{tpu_custom_call.1} parent=55 // pred_check_branch
          %2885 = sbr.rel (%p2883) target = $region76
        $region75: #{tpu_custom_call.1} parent=55 // pred_region
          %s2886 = smul.u32 14, %s23
        $region76: #{tpu_custom_call.1} parent=55 // pred_fallthru
          _
      $region56: #{tpu_custom_call.1} parent=5 // pred_fallthru
        _
      %p2887 = scmp.le.s32.totalorder 2, %s18
      // Predicated region
      $region77: #{tpu_custom_call.1} parent=5 // pred_check
        %p2888 = pneg %p2887
      $region78: #{tpu_custom_call.1} parent=5 // pred_check_branch
        %2890 = sbr.rel (%p2888) target = $region80
      $region79: #{tpu_custom_call.1} parent=5 // pred_region
        %s2891 = ssub.s32 %s18, 2
        // Predicated region
        $region81: #{tpu_custom_call.1} parent=79 // pred_check
          %p2892 = pneg %p241
        $region82: #{tpu_custom_call.1} parent=79 // pred_check_branch
          %2894 = sbr.rel (%p2892) target = $region84
        $region83: #{tpu_custom_call.1} parent=79 // pred_region
          %s2895 = smul.u32 14, %s24
          %p2896 = scmp.lt.s32.totalorder %s2895, 55
          %s2897 = scalar_select %p2896, %s2895, 55
          %s2898 = smul.addr %s2897, 8
          %s2899 = scalar_lea.vmem %s9, %s2898
        $region84: #{tpu_custom_call.1} parent=79 // pred_fallthru
          _
      $region80: #{tpu_custom_call.1} parent=5 // pred_fallthru
        _
    $region6: #{tpu_custom_call.1} parent=1 // loop_footer
      %s22 = sadd.s32 1, %s18
    $region7: #{tpu_custom_call.1} parent=1 // loop_footer_branch
      %17 = sbr.rel target = $region3
    $region8: #{tpu_custom_call.1} parent=1 // loop_exit
      _
    %2900 = vsyncpa [#allocation3], 1
    %s2901 = scalar_lea.sflag [#allocation3], 1
    %2902 = vsyncpa %s2901, 1
    %2903 = vsyncpa [#allocation5], 1
    %2904 = vsyncpa [#allocation8], 1

</llo_original>
